<compile_context>
chip_gen: v6e
topology: v6e:2x2x1
jax: 0.10.0
libtpu: 0.0.40
codegen_flags: <defaults>
</compile_context>

<pallas_src>
import functools
import math

import jax
import jax.numpy as jnp
import numpy as np
from jax import lax
from jax.experimental import pallas as pl
from jax.experimental.pallas import tpu as pltpu


# ----------------------------------------------------------------------------
# SpeechBrain helpers (mirrored)
# ----------------------------------------------------------------------------
def get_padding_elem(L_in: int, stride: int, kernel_size: int, dilation: int):
    """Mirror of the PyTorch helper (number of elements to pad each side).

    NOTE: the module calls this with L_in = in_channels (SpeechBrain quirk);
    for stride == 1 it reduces to floor(dilation*(kernel_size-1)/2) per side.
    """
    if stride > 1:
        padding = [math.floor(kernel_size / 2), math.floor(kernel_size / 2)]
    else:
        L_out = math.floor((L_in - dilation * (kernel_size - 1) - 1) / stride) + 1
        padding = [math.floor((L_in - L_out) / 2), math.floor((L_in - L_out) / 2)]
    return padding


def _round_up(x: int, m: int) -> int:
    return ((x + m - 1) // m) * m


def _cdiv(a: int, b: int) -> int:
    return -(-a // b)


_TORCH_PAD_MODE = {"reflect": "reflect", "zeros": "constant",
                   "replicate": "edge", "circular": "wrap"}


# ----------------------------------------------------------------------------
# Pallas kernel
# ----------------------------------------------------------------------------
def _conv1d_kernel(x_ref, w_ref, b_ref, o_ref, *, K, dilation, Tt, im2col):
    """One (batch, time-tile) grid step.

    x_ref: (1, 1, Tt+Hpad, Cin_p)   overlapping input window   (compute dtype)
    w_ref: (K, Cin_p, Cout_p)  per-tap layout, or (K*Cin_p, Cout_p) for im2col
    b_ref: (1, Cout_p)              bias                        (f32)
    o_ref: (1, Tt, Cout_p)          output tile                 (out dtype)
    """
    win = x_ref[0, 0]                                   # (Tt+Hpad, Cin_p)

    if im2col:
        # Long-reduction path (only for Cin_p below the MXU reduction width).
        if K == 1:
            slab = win
        else:
            slab = jnp.concatenate(
                [win[k * dilation:k * dilation + Tt, :] for k in range(K)],
                axis=1)                                 # (Tt, K*Cin_p)
        acc = jnp.dot(slab, w_ref[...], preferred_element_type=jnp.float32)
    else:
        # Per-tap accumulating matmuls: shifted static slices feed the MXU
        # directly (no materialized slab, no window copy).
        acc = jnp.dot(win[0:Tt, :], w_ref[0], preferred_element_type=jnp.float32)
        for k in range(1, K):
            acc = acc + jnp.dot(win[k * dilation:k * dilation + Tt, :], w_ref[k],
                                preferred_element_type=jnp.float32)

    o_ref[0] = (acc + b_ref[...].astype(jnp.float32)).astype(o_ref.dtype)


# ----------------------------------------------------------------------------
# Wrapper (forward pass of _Conv1d, skip_transpose=False convention)
# ----------------------------------------------------------------------------
def conv1d_same_reflect(x, weight, bias, *, kernel_size, stride=1, dilation=1,
                        padding="same", padding_mode="reflect",
                        compute_dtype=None, out_dtype=None, im2col=None,
                        time_tile=None, vmem_budget_bytes=None,
                        single_buffer_consts=True):
    """Pallas implementation of _Conv1d.forward.

    x:      (B, T, Cin)    -- SpeechBrain batch x time x channel convention
    weight: (Cout, Cin, K) -- PyTorch nn.Conv1d weight layout
    bias:   (Cout,)
    compute_dtype: None -> x.dtype (exact parity); jnp.bfloat16 for MXU peak.
    returns (B, T_out, Cout)
    """
    B, T, Cin = x.shape
    Cout, wCin, K = weight.shape
    assert K == kernel_size and wCin == Cin
    if stride != 1:
        # TODO(synk): stride > 1 decimation path of _Conv1d not implemented.
        raise NotImplementedError("stride > 1 not implemented")

    compute_dtype = x.dtype if compute_dtype is None else compute_dtype
    out_dtype = x.dtype if out_dtype is None else out_dtype
    H = dilation * (K - 1)                   # receptive-field extent - 1

    # ---- padding (matches _manage_padding / 'causal' / 'valid') -------------
    if padding == "same":
        pad_l, pad_r = get_padding_elem(Cin, stride, K, dilation)  # L_in=Cin quirk
        assert pad_l >= 0 and pad_r >= 0, (
            "get_padding_elem(L_in=in_channels) gave negative padding: "
            "in_channels must exceed dilation*(kernel_size-1)")
        mode = _TORCH_PAD_MODE.get(padding_mode, padding_mode)
        if mode == "reflect":
            assert max(pad_l, pad_r) <= T - 1, "reflect pad needs pad <= T-1"
    elif padding == "causal":
        pad_l, pad_r, mode = H, 0, "constant"
    elif padding == "valid":
        pad_l, pad_r, mode = 0, 0, "constant"
    else:
        raise ValueError("padding must be 'same', 'valid' or 'causal'")

    x_pad = jnp.pad(x, ((0, 0), (pad_l, pad_r), (0, 0)), mode=mode)
    T_pad = T + pad_l + pad_r
    T_out = T_pad - H
    assert T_out >= 1, "sequence too short for this kernel/dilation"

    # ---- lane-dense channel padding, halo size -------------------------------
    Cin_p = _round_up(Cin, 128)
    Cout_p = _round_up(Cout, 128)
    Hpad = 0 if K == 1 else _round_up(H, 16)           # no halo for 1x1 convs

    # Keep the long (im2col) reduction only when Cin_p is below the v6e/v7x
    # MXU reduction width (256); otherwise per-tap matmuls are full width.
    if im2col is None:
        im2col = (K > 1) and (Cin_p < 256)

    cbytes = jnp.dtype(compute_dtype).itemsize
    obytes = jnp.dtype(out_dtype).itemsize

    # ---- generation-aware VMEM budget ----------------------------------------
    try:
        vmem_cap = int(pltpu.get_tpu_info().vmem_capacity_bytes)
    except Exception:
        vmem_cap = 64 * 1024 * 1024           # conservative (v7x per-TensorCore)
    if vmem_budget_bytes is None:
        # ~25 MiB on v7x (64 MiB VMEM), ~51 MiB on v5e/v6e (128 MiB VMEM).
        vmem_budget_bytes = min(int(0.40 * vmem_cap), 64 * 1024 * 1024)

    wbufs = 1 if single_buffer_consts else 2

    def vmem_bytes(tt):
        slab = tt * K * Cin_p * cbytes if (im2col and K > 1) else 0
        return (2 * (tt + Hpad) * Cin_p * cbytes     # input window (double buffer)
                + wbufs * K * Cin_p * Cout_p * cbytes  # weights
                + 2 * tt * Cout_p * obytes           # output (double buffer)
                + tt * Cout_p * 4                    # f32 accumulator
                + slab)                              # im2col temp (small-Cin path)

    # ---- time tile: start large, shrink to budget, keep >= 2 grid steps ------
    step = 16
    tt0 = 1024 if time_tile is None else int(time_tile)
    Tt = max(step, _round_up(min(tt0, max(T_out, 1)), step))
    while Tt > step and vmem_bytes(Tt) > vmem_budget_bytes:
        Tt = max(step, _round_up(Tt // 2, step))
    # v7x has 2 TensorCores: make sure the grid has at least 2 steps of work.
    while Tt > step and B * _cdiv(T_out, Tt) < 2:
        Tt = max(step, _round_up(Tt // 2, step))

    nT = _cdiv(T_out, Tt)
    T_out_p = nT * Tt
    L = nT * Tt + Hpad                       # padded time length fed to kernel
    Wrows = Tt + Hpad

    # ---- overlapping input windows (no in-kernel concat / halo operand) ------
    xc = jnp.pad(x_pad, ((0, 0), (0, L - T_pad), (0, Cin_p - Cin))
                 ).astype(compute_dtype)                      # (B, L, Cin_p)
    if K == 1:
        x_win = xc.reshape(B, nT, Tt, Cin_p)                  # pure reshape
    else:
        idx = jnp.arange(nT)[:, None] * Tt + jnp.arange(Wrows)[None, :]
        x_win = xc[:, idx, :]                                 # (B, nT, Wrows, Cin_p)

    # ---- weights / bias -------------------------------------------------------
    w_t = jnp.transpose(weight, (2, 1, 0))                    # (K, Cin, Cout)
    w_t = jnp.pad(w_t, ((0, 0), (0, Cin_p - Cin), (0, Cout_p - Cout))
                  ).astype(compute_dtype)
    w_arr = w_t.reshape(K * Cin_p, Cout_p) if im2col else w_t
    b2 = jnp.pad(bias, (0, Cout_p - Cout)).reshape(1, Cout_p).astype(jnp.float32)

    kernel = functools.partial(_conv1d_kernel, K=K, dilation=dilation,
                               Tt=Tt, im2col=im2col)

    vmem_limit = max(min(int(1.5 * vmem_bytes(Tt)), int(0.75 * vmem_cap)),
                     16 * 1024 * 1024)
    flops = 2 * B * T_out_p * K * Cin_p * Cout_p
    bytes_accessed = int(x_win.size * cbytes + w_arr.size * cbytes + b2.size * 4
                         + B * T_out_p * Cout_p * obytes)

    def _call(buffer_consts_once):
        # Constant-index operands (weights / bias) single-buffered when possible.
        const_kw = dict(pipeline_mode=pl.Buffered(1)) if buffer_consts_once else {}
        if im2col:
            w_spec = pl.BlockSpec((K * Cin_p, Cout_p), lambda b, t: (0, 0),
                                  **const_kw)
        else:
            w_spec = pl.BlockSpec((K, Cin_p, Cout_p), lambda b, t: (0, 0, 0),
                                  **const_kw)
        b_spec = pl.BlockSpec((1, Cout_p), lambda b, t: (0, 0), **const_kw)
        out = pl.pallas_call(
            kernel,
            out_shape=jax.ShapeDtypeStruct((B, T_out_p, Cout_p), out_dtype),
            grid=(B, nT),
            in_specs=[
                pl.BlockSpec((1, 1, Wrows, Cin_p), lambda b, t: (b, t, 0, 0)),
                w_spec,
                b_spec,
            ],
            out_specs=pl.BlockSpec((1, Tt, Cout_p), lambda b, t: (b, t, 0)),
            compiler_params=pltpu.CompilerParams(
                dimension_semantics=("parallel", "parallel"),
                vmem_limit_bytes=vmem_limit),
            cost_estimate=pl.CostEstimate(flops=flops, transcendentals=0,
                                          bytes_accessed=bytes_accessed),
        )(x_win, w_arr, b2)
        return jax.block_until_ready(out)

    if single_buffer_consts:
        try:
            out = _call(True)
        except Exception:
            # Older JAX / unsupported Buffered(1): fall back to default pipeline.
            out = _call(False)
    else:
        out = _call(False)

    return out[:, :T_out, :Cout]


# ----------------------------------------------------------------------------
# Pure-JAX reference (for the sanity check)
# ----------------------------------------------------------------------------
def _reference_conv(x, weight, bias, kernel_size, dilation):
    Cin = x.shape[-1]
    pad_l, pad_r = get_padding_elem(Cin, 1, kernel_size, dilation)
    x_pad = jnp.pad(x, ((0, 0), (pad_l, pad_r), (0, 0)), mode="reflect")
    w_k = jnp.transpose(weight, (2, 1, 0))                  # (K, Cin, Cout) == WIO
    y = lax.conv_general_dilated(
        x_pad, w_k, window_strides=(1,), padding="VALID",
        rhs_dilation=(dilation,),
        dimension_numbers=("NWC", "WIO", "NWC"))
    return y + bias[None, None, :]


if __name__ == "__main__":
    key = jax.random.PRNGKey(0)

    # --- Case 1: module defaults (K=5, dilation=1) ----------------------------
    B, T, Cin, Cout, K = 2, 16, 8, 16, 5
    k1, k2, k3, key = jax.random.split(key, 4)
    x = jax.random.normal(k1, (B, T, Cin), dtype=jnp.float32)
    bound = 1.0 / math.sqrt(Cin * K)
    w = jax.random.uniform(k2, (Cout, Cin, K), jnp.float32, -bound, bound)
    b = jax.random.uniform(k3, (Cout,), jnp.float32, -bound, bound)

    ref = _reference_conv(x, w, b, K, dilation=1)

    # f32 compute (parity with the PyTorch module)
    out_f32 = jax.block_until_ready(conv1d_same_reflect(x, w, b, kernel_size=K))
    assert out_f32.shape == (B, T, Cout), out_f32.shape
    np.testing.assert_allclose(np.asarray(out_f32), np.asarray(ref),
                               rtol=1e-5, atol=1e-5)

    # opt-in bf16 MXU compute path
    out_bf16 = jax.block_until_ready(conv1d_same_reflect(
        x, w, b, kernel_size=K, compute_dtype=jnp.bfloat16))
    np.testing.assert_allclose(np.asarray(out_bf16), np.asarray(ref),
                               rtol=5e-2, atol=5e-2)

    # --- Case 2: dilated kernel + multi-tile time axis, per-tap matmul path ---
    B2, T2, Cin2, Cout2, K2, d2 = 2, 40, 8, 16, 3, 2
    k1, k2, k3, key = jax.random.split(key, 4)
    x_b = jax.random.normal(k1, (B2, T2, Cin2), dtype=jnp.float32)
    bound2 = 1.0 / math.sqrt(Cin2 * K2)
    w_b = jax.random.uniform(k2, (Cout2, Cin2, K2), jnp.float32, -bound2, bound2)
    b_b = jax.random.uniform(k3, (Cout2,), jnp.float32, -bound2, bound2)

    out2 = jax.block_until_ready(conv1d_same_reflect(
        x_b, w_b, b_b, kernel_size=K2, dilation=d2,
        time_tile=16, im2col=False))                # exercises the per-tap path
    ref2 = _reference_conv(x_b, w_b, b_b, K2, dilation=d2)
    assert out2.shape == (B2, T2, Cout2), out2.shape
    np.testing.assert_allclose(np.asarray(out2), np.asarray(ref2),
                               rtol=1e-5, atol=1e-5)

    # --- Case 3: 1x1 conv (K=1, SE-block style) -- no halo, no gather ---------
    B3, T3, Cin3, Cout3 = 2, 16, 8, 16
    k1, k2, k3, key = jax.random.split(key, 4)
    x_c = jax.random.normal(k1, (B3, T3, Cin3), dtype=jnp.float32)
    bound3 = 1.0 / math.sqrt(Cin3)
    w_c = jax.random.uniform(k2, (Cout3, Cin3, 1), jnp.float32, -bound3, bound3)
    b_c = jax.random.uniform(k3, (Cout3,), jnp.float32, -bound3, bound3)

    out3 = jax.block_until_ready(conv1d_same_reflect(x_c, w_c, b_c, kernel_size=1))
    ref3 = _reference_conv(x_c, w_c, b_c, 1, dilation=1)
    assert out3.shape == (B3, T3, Cout3), out3.shape
    np.testing.assert_allclose(np.asarray(out3), np.asarray(ref3),
                               rtol=1e-5, atol=1e-5)

    print("KERNEL_OK")
</pallas_src>

<mosaic_0001>
module attributes {stable_mosaic.version = 11 : i64} {
  func.func @_conv1d_kernel(%arg0: i32, %arg1: i32, %arg2: memref<1x1x32x128xf32, #tpu.memory_space<vmem>>, %arg3: memref<640x128xf32, #tpu.memory_space<vmem>>, %arg4: memref<1x128xf32, #tpu.memory_space<vmem>>, %arg5: memref<1x16x128xf32, #tpu.memory_space<vmem>>) attributes {dimension_semantics = [#tpu.dimension_semantics<parallel>, #tpu.dimension_semantics<parallel>], iteration_bounds = array<i64: 2, 1>, scalar_prefetch = 0 : i64, scratch_operands = 0 : i64, tpu.core_type = #tpu.core_type<tc>, window_params = [{transform_indices = @transform_0, window_bounds = array<i64: 1, 1, 32, 128>}, {pipeline_mode = #tpu.pipeline_mode<synchronous>, transform_indices = @transform_1, window_bounds = array<i64: 640, 128>}, {pipeline_mode = #tpu.pipeline_mode<synchronous>, transform_indices = @transform_2, window_bounds = array<i64: 1, 128>}, {transform_indices = @transform_3, window_bounds = array<i64: 1, 16, 128>}]} {
    %c0 = arith.constant 0 : index
    %c0_0 = arith.constant 0 : index
    %c0_1 = arith.constant 0 : index
    %c0_2 = arith.constant 0 : index
    %0 = vector.load %arg2[%c0, %c0_0, %c0_1, %c0_2] : memref<1x1x32x128xf32, #tpu.memory_space<vmem>>, vector<1x1x32x128xf32>
    %1 = vector.shape_cast %0 : vector<1x1x32x128xf32> to vector<32x128xf32>
    %2 = vector.extract_strided_slice %1 {offsets = [0, 0], sizes = [16, 128], strides = [1, 1]} : vector<32x128xf32> to vector<16x128xf32>
    %3 = vector.extract_strided_slice %1 {offsets = [1, 0], sizes = [16, 128], strides = [1, 1]} : vector<32x128xf32> to vector<16x128xf32>
    %4 = vector.extract_strided_slice %1 {offsets = [2, 0], sizes = [16, 128], strides = [1, 1]} : vector<32x128xf32> to vector<16x128xf32>
    %5 = vector.extract_strided_slice %1 {offsets = [3, 0], sizes = [16, 128], strides = [1, 1]} : vector<32x128xf32> to vector<16x128xf32>
    %6 = vector.extract_strided_slice %1 {offsets = [4, 0], sizes = [16, 128], strides = [1, 1]} : vector<32x128xf32> to vector<16x128xf32>
    %7 = tpu.concatenate %2, %3, %4, %5, %6 in 1 : vector<16x128xf32>, vector<16x128xf32>, vector<16x128xf32>, vector<16x128xf32>, vector<16x128xf32> -> vector<16x640xf32>
    %c0_3 = arith.constant 0 : index
    %c0_4 = arith.constant 0 : index
    %8 = vector.load %arg3[%c0_3, %c0_4] : memref<640x128xf32, #tpu.memory_space<vmem>>, vector<640x128xf32>
    %cst = arith.constant dense<0.000000e+00> : vector<16x128xf32>
    %9 = tpu.matmul %7, %8, %cst {dimension_numbers = #tpu.dot_dimension_numbers<[1], [0], [0], [1], [0, 0, 1, 1], [], []>} : vector<16x640xf32>, vector<640x128xf32>, vector<16x128xf32> -> vector<16x128xf32>
    %c0_5 = arith.constant 0 : index
    %c0_6 = arith.constant 0 : index
    %10 = vector.load %arg4[%c0_5, %c0_6] : memref<1x128xf32, #tpu.memory_space<vmem>>, vector<1x128xf32>
    %11 = vector.broadcast %10 : vector<1x128xf32> to vector<16x128xf32>
    %12 = arith.addf %9, %11 : vector<16x128xf32>
    %c0_7 = arith.constant 0 : index
    %c0_8 = arith.constant 0 : index
    %c0_9 = arith.constant 0 : index
    %13 = vector.load %arg5[%c0_7, %c0_8, %c0_9] : memref<1x16x128xf32, #tpu.memory_space<vmem>>, vector<1x16x128xf32>
    %14 = vector.shape_cast %13 : vector<1x16x128xf32> to vector<16x128xf32>
    %15 = vector.shape_cast %12 : vector<16x128xf32> to vector<1x16x128xf32>
    tpu.vector_store %arg5[%c0_7, %c0_8, %c0_9], %15 {strides = array<i32>} : memref<1x16x128xf32, #tpu.memory_space<vmem>>, vector<1x16x128xf32>,
    return
  }
  func.func @transform_0(%arg0: i32, %arg1: i32) -> (i32, i32, i32, i32) {
    %c0_i32 = arith.constant 0 : i32
    %c0_i32_0 = arith.constant 0 : i32
    %c0_i32_1 = arith.constant 0 : i32
    return %arg0, %arg1, %c0_i32, %c0_i32_0 : i32, i32, i32, i32
  }
  func.func @transform_1(%arg0: i32, %arg1: i32) -> (i32, i32) {
    %c0_i32 = arith.constant 0 : i32
    %c0_i32_0 = arith.constant 0 : i32
    %c0_i32_1 = arith.constant 0 : i32
    return %c0_i32, %c0_i32_0 : i32, i32
  }
  func.func @transform_2(%arg0: i32, %arg1: i32) -> (i32, i32) {
    %c0_i32 = arith.constant 0 : i32
    %c0_i32_0 = arith.constant 0 : i32
    %c0_i32_1 = arith.constant 0 : i32
    return %c0_i32, %c0_i32_0 : i32, i32
  }
  func.func @transform_3(%arg0: i32, %arg1: i32) -> (i32, i32, i32) {
    %c0_i32 = arith.constant 0 : i32
    %c0_i32_0 = arith.constant 0 : i32
    return %arg0, %arg1, %c0_i32 : i32, i32, i32
  }
}

module attributes {stable_mosaic.version = 11 : i64} {
  func.func @_conv1d_kernel(%arg0: i32, %arg1: i32, %arg2: memref<1x1x32x128xf32, #tpu.memory_space<vmem>>, %arg3: memref<640x128xf32, #tpu.memory_space<vmem>>, %arg4: memref<1x128xf32, #tpu.memory_space<vmem>>, %arg5: memref<1x16x128xf32, #tpu.memory_space<vmem>>) attributes {dimension_semantics = [#tpu.dimension_semantics<parallel>, #tpu.dimension_semantics<parallel>], iteration_bounds = array<i64: 2, 1>, scalar_prefetch = 0 : i64, scratch_operands = 0 : i64, tpu.core_type = #tpu.core_type<tc>, window_params = [{transform_indices = @transform_0, window_bounds = array<i64: 1, 1, 32, 128>}, {pipeline_mode = #tpu.pipeline_mode<synchronous>, transform_indices = @transform_1, window_bounds = array<i64: 640, 128>}, {pipeline_mode = #tpu.pipeline_mode<synchronous>, transform_indices = @transform_2, window_bounds = array<i64: 1, 128>}, {transform_indices = @transform_3, window_bounds = array<i64: 1, 16, 128>}]} {
    %c0 = arith.constant 0 : index
    %c0_0 = arith.constant 0 : index
    %c0_1 = arith.constant 0 : index
    %c0_2 = arith.constant 0 : index
    %0 = vector.load %arg2[%c0, %c0_0, %c0_1, %c0_2] : memref<1x1x32x128xf32, #tpu.memory_space<vmem>>, vector<1x1x32x128xf32>
    %1 = vector.shape_cast %0 : vector<1x1x32x128xf32> to vector<32x128xf32>
    %2 = vector.extract_strided_slice %1 {offsets = [0, 0], sizes = [16, 128], strides = [1, 1]} : vector<32x128xf32> to vector<16x128xf32>
    %3 = vector.extract_strided_slice %1 {offsets = [1, 0], sizes = [16, 128], strides = [1, 1]} : vector<32x128xf32> to vector<16x128xf32>
    %4 = vector.extract_strided_slice %1 {offsets = [2, 0], sizes = [16, 128], strides = [1, 1]} : vector<32x128xf32> to vector<16x128xf32>
    %5 = vector.extract_strided_slice %1 {offsets = [3, 0], sizes = [16, 128], strides = [1, 1]} : vector<32x128xf32> to vector<16x128xf32>
    %6 = vector.extract_strided_slice %1 {offsets = [4, 0], sizes = [16, 128], strides = [1, 1]} : vector<32x128xf32> to vector<16x128xf32>
    %7 = tpu.concatenate %2, %3, %4, %5, %6 in 1 : vector<16x128xf32>, vector<16x128xf32>, vector<16x128xf32>, vector<16x128xf32>, vector<16x128xf32> -> vector<16x640xf32>
    %c0_3 = arith.constant 0 : index
    %c0_4 = arith.constant 0 : index
    %8 = vector.load %arg3[%c0_3, %c0_4] : memref<640x128xf32, #tpu.memory_space<vmem>>, vector<640x128xf32>
    %cst = arith.constant dense<0.000000e+00> : vector<16x128xf32>
    %9 = tpu.matmul %7, %8, %cst {dimension_numbers = #tpu.dot_dimension_numbers<[1], [0], [0], [1], [0, 0, 1, 1], [], []>} : vector<16x640xf32>, vector<640x128xf32>, vector<16x128xf32> -> vector<16x128xf32>
    %c0_5 = arith.constant 0 : index
    %c0_6 = arith.constant 0 : index
    %10 = vector.load %arg4[%c0_5, %c0_6] : memref<1x128xf32, #tpu.memory_space<vmem>>, vector<1x128xf32>
    %11 = vector.broadcast %10 : vector<1x128xf32> to vector<16x128xf32>
    %12 = arith.addf %9, %11 : vector<16x128xf32>
    %c0_7 = arith.constant 0 : index
    %c0_8 = arith.constant 0 : index
    %c0_9 = arith.constant 0 : index
    %13 = vector.load %arg5[%c0_7, %c0_8, %c0_9] : memref<1x16x128xf32, #tpu.memory_space<vmem>>, vector<1x16x128xf32>
    %14 = vector.shape_cast %13 : vector<1x16x128xf32> to vector<16x128xf32>
    %15 = vector.shape_cast %12 : vector<16x128xf32> to vector<1x16x128xf32>
    tpu.vector_store %arg5[%c0_7, %c0_8, %c0_9], %15 {strides = array<i32>} : memref<1x16x128xf32, #tpu.memory_space<vmem>>, vector<1x16x128xf32>,
    return
  }
  func.func @transform_0(%arg0: i32, %arg1: i32) -> (i32, i32, i32, i32) {
    %c0_i32 = arith.constant 0 : i32
    %c0_i32_0 = arith.constant 0 : i32
    %c0_i32_1 = arith.constant 0 : i32
    return %arg0, %arg1, %c0_i32, %c0_i32_0 : i32, i32, i32, i32
  }
  func.func @transform_1(%arg0: i32, %arg1: i32) -> (i32, i32) {
    %c0_i32 = arith.constant 0 : i32
    %c0_i32_0 = arith.constant 0 : i32
    %c0_i32_1 = arith.constant 0 : i32
    return %c0_i32, %c0_i32_0 : i32, i32
  }
  func.func @transform_2(%arg0: i32, %arg1: i32) -> (i32, i32) {
    %c0_i32 = arith.constant 0 : i32
    %c0_i32_0 = arith.constant 0 : i32
    %c0_i32_1 = arith.constant 0 : i32
    return %c0_i32, %c0_i32_0 : i32, i32
  }
  func.func @transform_3(%arg0: i32, %arg1: i32) -> (i32, i32, i32) {
    %c0_i32 = arith.constant 0 : i32
    %c0_i32_0 = arith.constant 0 : i32
    return %arg0, %arg1, %c0_i32 : i32, i32, i32
  }
}

</mosaic_0001>

<llo_original>
// kernel: tpu_custom_call.1
$region0: #{tpu_custom_call.1}
  #allocation0 [shape = 'u32[]', space=smem, size = 0x4, offset = 0x4, fixed_abs, tag = 'smem constant byte address 0x4 - core index']
  #allocation1 [shape = 'u32[144,128]{1,0:T(1,128)}', space=vmem, size = 0x12000, scoped, tag = 'internal scratch']
  %s0 = inlined_call_operand.hbm [shape: f32[2,1,32,128], index: 0, kind: input, shape index: {}]
  %s1 = inlined_call_operand.hbm [shape: f32[640,128], index: 1, kind: input, shape index: {}]
  %s2 = inlined_call_operand.vmem [shape: f32[1,128], index: 2, kind: input, shape index: {}]
  %s3 = inlined_call_operand.hbm [shape: f32[2,16,128], index: 3, kind: output, shape index: {}]
  %s4 = sld [smem:[#allocation0]]
  $region53: #{tpu_custom_call.1} parent=0
    _
  %s6 = ssub.s32 1, %s4
  %s7 = scalar_select 0, %s6, %s4
  $region1: #{tpu_custom_call.1} parent=0
    #allocation2 [shape = 'u8[32768]{0}', space=vmem, size = 0x8000, scoped, tag = 'input window, operand 0']
    #allocation3 [shape = 's32[2]{0}', space=sflag, size = 0x8, scoped, tag = 'scoped memory for tpu_custom_call.1']
    #allocation4 [shape = 's32[2]{0}', space=sflag, size = 0x8, scoped, tag = 'scoped memory for tpu_custom_call.1']
    #allocation5 [shape = 'u8[327680]{0}', space=vmem, size = 0x50000, scoped, tag = 'input window, operand 1, single buffered']
    #allocation6 [shape = 's32[1]{0}', space=sflag, size = 0x4, scoped, tag = 'scoped memory for tpu_custom_call.1']
    #allocation7 [shape = 'u8[16384]{0}', space=vmem, size = 0x4000, scoped, tag = 'output window, operand 0']
    %8 = vsyncpa [#allocation3], 0
    %s9 = scalar_lea.sflag [#allocation3], 1
    %10 = vsyncpa %s9, 0
    %11 = vsyncpa [#allocation6], 0
    %12 = vsyncpa [#allocation4], 0
    %s13 = scalar_lea.sflag [#allocation4], 1
    %14 = vsyncpa %s13, 0
    loop: start=0, step=1, limit=4
    $region2: #{tpu_custom_call.1} parent=1 // loop_pre_header
      _
    $region3: #{tpu_custom_call.1} parent=1 // loop_header
      %s16 = sphi 0, %s20
      %p17 = scmp.ge.s32.totalorder %s16, 4
      %s23 = sphi 0, %s35
      %s24 = sphi 0, %s31
      %s25 = sphi 0, %s23
      %s26 = sphi 0, %s24
      %s27 = sphi 0, %s25
      %s28 = sphi 0, %s26
      %s40 = sphi 0, %s42
      %s43 = sphi 0, %s40
      %s44 = sphi 0, %s43
      %s60 = sphi 0, %s44
      %s64 = sphi 0, %s64
      %s66 = sphi 0, %s64
      %s67 = sphi 0, %s66
      %s81 = sphi 0, %s67
      %s85 = sphi 0, %s85
      %s87 = sphi 0, %s85
      %s88 = sphi 0, %s87
      %s102 = sphi 0, %s88
      %s110 = sphi 0, %s112
      %s113 = sphi 0, %s110
      %s114 = sphi 0, %s113
      %s130 = sphi 0, %s114
    $region4: #{tpu_custom_call.1} parent=1 // loop_header_branch
      %19 = sbr.rel (%p17) target = $region8
    $region5: #{tpu_custom_call.1} parent=1 // loop_body
      %s21 = ssub.s32 %s16, 1
      %s22 = ssub.s32 %s16, 2
      %s29 = sadd.s32 1, %s24
      %p30 = scmp.ge.s32.totalorder %s29, 1
      %s31 = scalar_select %p30, 0, %s29
      %s32 = sadd.s32 1, %s23
      %s33 = scalar_select %p30, %s32, %s23
      %p34 = scmp.ge.s32.totalorder %s33, 2
      %s35 = scalar_select %p34, 0, %s33
      %s36 = ssub.s32 %s23, %s35
      %s37 = ssub.s32 %s24, %s31
      %s38 = sor.u32 %s36, %s37
      %p39 = scmp.eq.s32.totalorder %s38, 0
      %s41 = sadd.s32 %s40, 1
      %s42 = scalar_select %p39, %s40, %s41
      %p45 = pneg %p39
      %p46 = scmp.eq.s32.totalorder %s16, 1
      %p47 = por %p45, %p46
      %p48 = scmp.ne.s32.totalorder %s40, %s43
      %p49 = scmp.eq.s32.totalorder %s16, 0
      %p50 = por %p48, %p49
      %p51 = scmp.ne.s32.totalorder %s40, %s43
      %p52 = scmp.eq.s32.totalorder %s21, 1
      %p53 = por %p51, %p52
      %p54 = scmp.ne.s32.totalorder %s43, %s44
      %p55 = scmp.eq.s32.totalorder %s21, 0
      %p56 = por %p54, %p55
      %p57 = scmp.ne.s32.totalorder %s43, %s44
      %p58 = scmp.eq.s32.totalorder %s22, 1
      %p59 = por %p57, %p58
      %p61 = scmp.ne.s32.totalorder %s44, %s60
      %p62 = scmp.eq.s32.totalorder %s22, 0
      %p63 = por %p61, %p62
      %s65 = sadd.s32 %s64, 1
      %p68 = scmp.eq.s32.totalorder %s16, 1
      %p69 = scmp.ne.s32.totalorder %s64, %s66
      %p70 = scmp.eq.s32.totalorder %s16, 0
      %p71 = por %p69, %p70
      %p72 = scmp.ne.s32.totalorder %s64, %s66
      %p73 = scmp.eq.s32.totalorder %s21, 1
      %p74 = por %p72, %p73
      %p75 = scmp.ne.s32.totalorder %s66, %s67
      %p76 = scmp.eq.s32.totalorder %s21, 0
      %p77 = por %p75, %p76
      %p78 = scmp.ne.s32.totalorder %s66, %s67
      %p79 = scmp.eq.s32.totalorder %s22, 1
      %p80 = por %p78, %p79
      %p82 = scmp.ne.s32.totalorder %s67, %s81
      %p83 = scmp.eq.s32.totalorder %s22, 0
      %p84 = por %p82, %p83
      %s86 = sadd.s32 %s85, 1
      %p89 = scmp.eq.s32.totalorder %s16, 1
      %p90 = scmp.ne.s32.totalorder %s85, %s87
      %p91 = scmp.eq.s32.totalorder %s16, 0
      %p92 = por %p90, %p91
      %p93 = scmp.ne.s32.totalorder %s85, %s87
      %p94 = scmp.eq.s32.totalorder %s21, 1
      %p95 = por %p93, %p94
      %p96 = scmp.ne.s32.totalorder %s87, %s88
      %p97 = scmp.eq.s32.totalorder %s21, 0
      %p98 = por %p96, %p97
      %p99 = scmp.ne.s32.totalorder %s87, %s88
      %p100 = scmp.eq.s32.totalorder %s22, 1
      %p101 = por %p99, %p100
      %p103 = scmp.ne.s32.totalorder %s88, %s102
      %p104 = scmp.eq.s32.totalorder %s22, 0
      %p105 = por %p103, %p104
      %s106 = ssub.s32 %s23, %s35
      %s107 = ssub.s32 %s24, %s31
      %s108 = sor.u32 %s106, %s107
      %p109 = scmp.eq.s32.totalorder %s108, 0
      %s111 = sadd.s32 %s110, 1
      %s112 = scalar_select %p109, %s110, %s111
      %p115 = pneg %p109
      %p116 = scmp.eq.s32.totalorder %s16, 1
      %p117 = por %p115, %p116
      %p118 = scmp.ne.s32.totalorder %s110, %s113
      %p119 = scmp.eq.s32.totalorder %s16, 0
      %p120 = por %p118, %p119
      %p121 = scmp.ne.s32.totalorder %s110, %s113
      %p122 = scmp.eq.s32.totalorder %s21, 1
      %p123 = por %p121, %p122
      %p124 = scmp.ne.s32.totalorder %s113, %s114
      %p125 = scmp.eq.s32.totalorder %s21, 0
      %p126 = por %p124, %p125
      %p127 = scmp.ne.s32.totalorder %s113, %s114
      %p128 = scmp.eq.s32.totalorder %s22, 1
      %p129 = por %p127, %p128
      %p131 = scmp.ne.s32.totalorder %s114, %s130
      %p132 = scmp.eq.s32.totalorder %s22, 0
      %p133 = por %p131, %p132
      %p134 = scmp.le.s32.totalorder 1, %s16
      %p135 = scmp.lt.s32.totalorder %s16, 3
      %p136 = pnand %p134, %p135
      %p137 = pneg %p136
      // Predicated region
      $region9: #{tpu_custom_call.1} parent=5 // pred_check
        _
      $region10: #{tpu_custom_call.1} parent=5 // pred_check_branch
        %139 = sbr.rel (%p136) target = $region12
      $region11: #{tpu_custom_call.1} parent=5 // pred_region
        %s140 = ssub.s32 %s16, 1
        // Predicated region
        $region13: #{tpu_custom_call.1} parent=11 // pred_check
          %p141 = pneg %p77
        $region14: #{tpu_custom_call.1} parent=11 // pred_check_branch
          %143 = sbr.rel (%p141) target = $region16
        $region15: #{tpu_custom_call.1} parent=11 // pred_region
          %s145 = ssub.s32 10240, 10240
          %146 = vsyncadd [#allocation6], %s145
          %s147 = sshll.u32 [#allocation5], 4
          %s148 = int_to_ptr.vmem [resolvable:$true] %s147
          %153 = dma.hbm_to_vmem [thread:$0]  %s1, 10240, %s148, [#allocation6], 128, 128, 8
        $region16: #{tpu_custom_call.1} parent=11 // pred_fallthru
          _
        // Predicated region
        $region17: #{tpu_custom_call.1} parent=11 // pred_check
          %p154 = pneg %p98
        $region18: #{tpu_custom_call.1} parent=11 // pred_check_branch
          %156 = sbr.rel (%p154) target = $region20
        $region19: #{tpu_custom_call.1} parent=11 // pred_region
          _
        $region20: #{tpu_custom_call.1} parent=11 // pred_fallthru
          _
      $region12: #{tpu_custom_call.1} parent=5 // pred_fallthru
        _
      %p157 = scmp.lt.s32.totalorder %s16, 2
      // Predicated region
      $region21: #{tpu_custom_call.1} parent=5 // pred_check
        %p158 = pneg %p157
      $region22: #{tpu_custom_call.1} parent=5 // pred_check_branch
        %160 = sbr.rel (%p158) target = $region24
      $region23: #{tpu_custom_call.1} parent=5 // pred_region
        // Predicated region
        $region25: #{tpu_custom_call.1} parent=23 // pred_check
          %p161 = pneg %p50
        $region26: #{tpu_custom_call.1} parent=23 // pred_check_branch
          %163 = sbr.rel (%p161) target = $region28
        $region27: #{tpu_custom_call.1} parent=23 // pred_region
          %s164 = sand.u32 %s40, 1
          %s165 = scalar_lea.sflag [#allocation3], %s164
          %s166 = sand.u32 %s40, 1
          %s167 = smul.addr %s166, 32
          %s168 = scalar_lea.vmem [#allocation2], %s167
          %s170 = ssub.s32 512, 512
          %171 = vsyncadd %s165, %s170
          %s172 = smul.addr %s24, 4
          %s173 = smul.addr %s23, 4
          %s174 = sadd.s32 %s172, %s173
          %s175 = smul.addr %s174, 128
          %s176 = scalar_lea.hbm %s0, %s175
          %s177 = sshll.u32 %s168, 4
          %s178 = int_to_ptr.vmem [resolvable:$true] %s177
          %183 = dma.hbm_to_vmem [thread:$0]  %s176, 512, %s178, %s165, 128, 128, 8
        $region28: #{tpu_custom_call.1} parent=23 // pred_fallthru
          _
      $region24: #{tpu_custom_call.1} parent=5 // pred_fallthru
        _
      %p184 = scmp.le.s32.totalorder 1, %s16
      %p185 = scmp.lt.s32.totalorder %s16, 3
      %p186 = pnand %p184, %p185
      %p187 = pneg %p186
      // Predicated region
      $region29: #{tpu_custom_call.1} parent=5 // pred_check
        _
      $region30: #{tpu_custom_call.1} parent=5 // pred_check_branch
        %189 = sbr.rel (%p186) target = $region32
      $region31: #{tpu_custom_call.1} parent=5 // pred_region
        %s190 = ssub.s32 %s16, 1
        %s191 = sand.u32 %s43, 1
        %s192 = scalar_lea.sflag [#allocation3], %s191
        %s193 = sand.u32 %s43, 1
        %s194 = smul.addr %s193, 32
        %s195 = scalar_lea.vmem [#allocation2], %s194
        // Predicated region
        $region33: #{tpu_custom_call.1} parent=31 // pred_check
          %p196 = pneg %p56
        $region34: #{tpu_custom_call.1} parent=31 // pred_check_branch
          %198 = sbr.rel (%p196) target = $region36
        $region35: #{tpu_custom_call.1} parent=31 // pred_region
          %199 = dma.done %s192, 512
        $region36: #{tpu_custom_call.1} parent=31 // pred_fallthru
          _
        // Predicated region
        $region37: #{tpu_custom_call.1} parent=31 // pred_check
          %p200 = pneg %p77
        $region38: #{tpu_custom_call.1} parent=31 // pred_check_branch
          %202 = sbr.rel (%p200) target = $region40
        $region39: #{tpu_custom_call.1} parent=31 // pred_region
          %203 = dma.done [#allocation6], 10240
        $region40: #{tpu_custom_call.1} parent=31 // pred_fallthru
          _
        %s204 = sand.u32 %s43, 1
        %s205 = scalar_lea.sflag [#allocation3], %s204
        %s206 = sand.u32 %s43, 1
        %s207 = smul.addr %s206, 32
        %s208 = scalar_lea.vmem [#allocation2], %s207
        %p209 = pneg %p56
        %p210 = pneg %p53
        %p211 = pneg %p77
        %p212 = pneg %p74
        %p213 = pneg %p98
        %p214 = pneg %p95
        %p215 = pneg %p126
        %p216 = pneg %p123
        %s217 = sand.u32 %s113, 1
        %s218 = scalar_lea.sflag [#allocation4], %s217
        %s219 = sand.u32 %s113, 1
        %s220 = smul.addr %s219, 16
        %s221 = scalar_lea.vmem [#allocation7], %s220
        %s222 = smul.u32 2, %s26
        %v223 = vld [vmem:[%s195] sm:$0xff]
        %v224 = vld [vmem:[%s195 + $0x8] sm:$0xff]
        %v225 = vld [vmem:[%s195 + $0x10] sm:$0xff]
        %vm229 = vcmask 1046528
        %v230 = vrot.slane %v223, 1
        %v231 = vrot.slane %v224, 1
        %v232 = vsel %vm229, %v230, %v231
        %v233 = vrot.slane %v225, 1
        %v234 = vsel %vm229, %v231, %v233
        %vm237 = vcmask 1045504
        %v238 = vrot.slane %v223, 2
        %v239 = vrot.slane %v224, 2
        %v240 = vsel %vm237, %v238, %v239
        %v241 = vrot.slane %v225, 2
        %v242 = vsel %vm237, %v239, %v241
        %vm245 = vcmask 1044480
        %v246 = vrot.slane %v223, 3
        %v247 = vrot.slane %v224, 3
        %v248 = vsel %vm245, %v246, %v247
        %v249 = vrot.slane %v225, 3
        %v250 = vsel %vm245, %v247, %v249
        %vm253 = vcmask 1043456
        %v254 = vrot.slane %v223, 4
        %v255 = vrot.slane %v224, 4
        %v256 = vsel %vm253, %v254, %v255
        %v257 = vrot.slane %v225, 4
        %v258 = vsel %vm253, %v255, %v257
        %v261 = vld [vmem:[#allocation5] sm:$0xff]
        %v262 = vld [vmem:[#allocation5 + $0x8] sm:$0xff]
        %v263 = vld [vmem:[#allocation5 + $0x10] sm:$0xff]
        %v264 = vld [vmem:[#allocation5 + $0x18] sm:$0xff]
        %v265 = vld [vmem:[#allocation5 + $0x20] sm:$0xff]
        %v266 = vld [vmem:[#allocation5 + $0x28] sm:$0xff]
        %v267 = vld [vmem:[#allocation5 + $0x30] sm:$0xff]
        %v268 = vld [vmem:[#allocation5 + $0x38] sm:$0xff]
        %v269 = vld [vmem:[#allocation5 + $0x40] sm:$0xff]
        %v270 = vld [vmem:[#allocation5 + $0x48] sm:$0xff]
        %v271 = vld [vmem:[#allocation5 + $0x50] sm:$0xff]
        %v272 = vld [vmem:[#allocation5 + $0x58] sm:$0xff]
        %v273 = vld [vmem:[#allocation5 + $0x60] sm:$0xff]
        %v274 = vld [vmem:[#allocation5 + $0x68] sm:$0xff]
        %v275 = vld [vmem:[#allocation5 + $0x70] sm:$0xff]
        %v276 = vld [vmem:[#allocation5 + $0x78] sm:$0xff]
        %v277 = vld [vmem:[#allocation5 + $0x80] sm:$0xff]
        %v278 = vld [vmem:[#allocation5 + $0x88] sm:$0xff]
        %v279 = vld [vmem:[#allocation5 + $0x90] sm:$0xff]
        %v280 = vld [vmem:[#allocation5 + $0x98] sm:$0xff]
        %v281 = vld [vmem:[#allocation5 + $0xa0] sm:$0xff]
        %v282 = vld [vmem:[#allocation5 + $0xa8] sm:$0xff]
        %v283 = vld [vmem:[#allocation5 + $0xb0] sm:$0xff]
        %v284 = vld [vmem:[#allocation5 + $0xb8] sm:$0xff]
        %v285 = vld [vmem:[#allocation5 + $0xc0] sm:$0xff]
        %v286 = vld [vmem:[#allocation5 + $0xc8] sm:$0xff]
        %v287 = vld [vmem:[#allocation5 + $0xd0] sm:$0xff]
        %v288 = vld [vmem:[#allocation5 + $0xd8] sm:$0xff]
        %v289 = vld [vmem:[#allocation5 + $0xe0] sm:$0xff]
        %v290 = vld [vmem:[#allocation5 + $0xe8] sm:$0xff]
        %v291 = vld [vmem:[#allocation5 + $0xf0] sm:$0xff]
        %v292 = vld [vmem:[#allocation5 + $0xf8] sm:$0xff]
        %v293 = vld [vmem:[#allocation5 + $0x100] sm:$0xff]
        %v294 = vld [vmem:[#allocation5 + $0x108] sm:$0xff]
        %v295 = vld [vmem:[#allocation5 + $0x110] sm:$0xff]
        %v296 = vld [vmem:[#allocation5 + $0x118] sm:$0xff]
        %v297 = vld [vmem:[#allocation5 + $0x120] sm:$0xff]
        %v298 = vld [vmem:[#allocation5 + $0x128] sm:$0xff]
        %v299 = vld [vmem:[#allocation5 + $0x130] sm:$0xff]
        %v300 = vld [vmem:[#allocation5 + $0x138] sm:$0xff]
        %v301 = vld [vmem:[#allocation5 + $0x140] sm:$0xff]
        %v302 = vld [vmem:[#allocation5 + $0x148] sm:$0xff]
        %v303 = vld [vmem:[#allocation5 + $0x150] sm:$0xff]
        %v304 = vld [vmem:[#allocation5 + $0x158] sm:$0xff]
        %v305 = vld [vmem:[#allocation5 + $0x160] sm:$0xff]
        %v306 = vld [vmem:[#allocation5 + $0x168] sm:$0xff]
        %v307 = vld [vmem:[#allocation5 + $0x170] sm:$0xff]
        %v308 = vld [vmem:[#allocation5 + $0x178] sm:$0xff]
        %v309 = vld [vmem:[#allocation5 + $0x180] sm:$0xff]
        %v310 = vld [vmem:[#allocation5 + $0x188] sm:$0xff]
        %v311 = vld [vmem:[#allocation5 + $0x190] sm:$0xff]
        %v312 = vld [vmem:[#allocation5 + $0x198] sm:$0xff]
        %v313 = vld [vmem:[#allocation5 + $0x1a0] sm:$0xff]
        %v314 = vld [vmem:[#allocation5 + $0x1a8] sm:$0xff]
        %v315 = vld [vmem:[#allocation5 + $0x1b0] sm:$0xff]
        %v316 = vld [vmem:[#allocation5 + $0x1b8] sm:$0xff]
        %v317 = vld [vmem:[#allocation5 + $0x1c0] sm:$0xff]
        %v318 = vld [vmem:[#allocation5 + $0x1c8] sm:$0xff]
        %v319 = vld [vmem:[#allocation5 + $0x1d0] sm:$0xff]
        %v320 = vld [vmem:[#allocation5 + $0x1d8] sm:$0xff]
        %v321 = vld [vmem:[#allocation5 + $0x1e0] sm:$0xff]
        %v322 = vld [vmem:[#allocation5 + $0x1e8] sm:$0xff]
        %v323 = vld [vmem:[#allocation5 + $0x1f0] sm:$0xff]
        %v324 = vld [vmem:[#allocation5 + $0x1f8] sm:$0xff]
        %v325 = vld [vmem:[#allocation5 + $0x200] sm:$0xff]
        %v326 = vld [vmem:[#allocation5 + $0x208] sm:$0xff]
        %v327 = vld [vmem:[#allocation5 + $0x210] sm:$0xff]
        %v328 = vld [vmem:[#allocation5 + $0x218] sm:$0xff]
        %v329 = vld [vmem:[#allocation5 + $0x220] sm:$0xff]
        %v330 = vld [vmem:[#allocation5 + $0x228] sm:$0xff]
        %v331 = vld [vmem:[#allocation5 + $0x230] sm:$0xff]
        %v332 = vld [vmem:[#allocation5 + $0x238] sm:$0xff]
        %v333 = vld [vmem:[#allocation5 + $0x240] sm:$0xff]
        %v334 = vld [vmem:[#allocation5 + $0x248] sm:$0xff]
        %v335 = vld [vmem:[#allocation5 + $0x250] sm:$0xff]
        %v336 = vld [vmem:[#allocation5 + $0x258] sm:$0xff]
        %v337 = vld [vmem:[#allocation5 + $0x260] sm:$0xff]
        %v338 = vld [vmem:[#allocation5 + $0x268] sm:$0xff]
        %v339 = vld [vmem:[#allocation5 + $0x270] sm:$0xff]
        %v340 = vld [vmem:[#allocation5 + $0x278] sm:$0xff]
        %v341 = vld [vmem:[%s2] sm:$0x1]
        %v343 = vlaneseq
        %v344 = vshrl.u32 %v343, 7
        %v345 = vsub.s32 0, %v344
        %v346 = vrot.slane %v341, %v345
        %348 = vmatprep.subr.mxu0 0.0
        %349 = vmatpush1.msra.mxu0 %v276
        %350 = vmatprep.subr.mxu0 0.0
        %351 = vmatpush1.msra.mxu0 %v275
        %352 = vmatprep.subr.mxu0 0.0
        %353 = vmatpush1.msra.mxu0 %v274
        %354 = vmatprep.subr.mxu0 0.0
        %355 = vmatpush1.msra.mxu0 %v273
        %356 = vmatprep.subr.mxu0 0.0
        %357 = vmatpush1.msra.mxu0 %v272
        %358 = vmatprep.subr.mxu0 0.0
        %359 = vmatpush1.msra.mxu0 %v271
        %360 = vmatprep.subr.mxu0 0.0
        %361 = vmatpush1.msra.mxu0 %v270
        %362 = vmatprep.subr.mxu0 0.0
        %363 = vmatpush1.msra.mxu0 %v269
        %364 = vmatprep.subr.mxu0 0.0
        %365 = vmatpush1.msra.mxu0 %v268
        %366 = vmatprep.subr.mxu0 0.0
        %367 = vmatpush1.msra.mxu0 %v267
        %368 = vmatprep.subr.mxu0 0.0
        %369 = vmatpush1.msra.mxu0 %v266
        %370 = vmatprep.subr.mxu0 0.0
        %371 = vmatpush1.msra.mxu0 %v265
        %372 = vmatprep.subr.mxu0 0.0
        %373 = vmatpush1.msra.mxu0 %v264
        %374 = vmatprep.subr.mxu0 0.0
        %375 = vmatpush1.msra.mxu0 %v263
        %376 = vmatprep.subr.mxu0 0.0
        %377 = vmatpush1.msra.mxu0 %v262
        %378 = vmatprep.subr.mxu0 0.0
        %379 = vmatpush1.msra.mxu0 %v261
        %380 = vmatprep.subr.mxu0 0.0
        %381 = vmatpush2.msra.mxu0 %v292
        %382 = vmatprep.subr.mxu0 0.0
        %383 = vmatpush2.msra.mxu0 %v291
        %384 = vmatprep.subr.mxu0 0.0
        %385 = vmatpush2.msra.mxu0 %v290
        %386 = vmatprep.subr.mxu0 0.0
        %387 = vmatpush2.msra.mxu0 %v289
        %388 = vmatprep.subr.mxu0 0.0
        %389 = vmatpush2.msra.mxu0 %v288
        %390 = vmatprep.subr.mxu0 0.0
        %391 = vmatpush2.msra.mxu0 %v287
        %392 = vmatprep.subr.mxu0 0.0
        %393 = vmatpush2.msra.mxu0 %v286
        %394 = vmatprep.subr.mxu0 0.0
        %395 = vmatpush2.msra.mxu0 %v285
        %396 = vmatprep.subr.mxu0 0.0
        %397 = vmatpush2.msra.mxu0 %v284
        %398 = vmatprep.subr.mxu0 0.0
        %399 = vmatpush2.msra.mxu0 %v283
        %400 = vmatprep.subr.mxu0 0.0
        %401 = vmatpush2.msra.mxu0 %v282
        %402 = vmatprep.subr.mxu0 0.0
        %403 = vmatpush2.msra.mxu0 %v281
        %404 = vmatprep.subr.mxu0 0.0
        %405 = vmatpush2.msra.mxu0 %v280
        %406 = vmatprep.subr.mxu0 0.0
        %407 = vmatpush2.msra.mxu0 %v279
        %408 = vmatprep.subr.mxu0 0.0
        %409 = vmatpush2.msra.mxu0 %v278
        %410 = vmatprep.subr.mxu0 0.0
        %411 = vmatpush2.msra.mxu0 %v277
        %412 = vmatprep.mubr.f32.mxu0 %v232
        %413 = vmatmul.mubr.f32.gmra.mxu0 %v223
        %v414 = vpop.f32.mrf.mxu0
        %v415 = vadd.f32 %v346, %v414
        %v416 = vpop.f32.mrf.mxu0
        %417 = vmatprep.mubr.f32.mxu0 %v234
        %418 = vmatmul.mubr.f32.gmra.mxu0 %v224
        %v419 = vpop.f32.mrf.mxu0
        %v420 = vadd.f32 %v346, %v419
        %v421 = vpop.f32.mrf.mxu0
        %422 = vdwg.mxu0
        %423 = vmatprep.subr.mxu0 0.0
        %424 = vmatpush1.msra.mxu0 %v308
        %425 = vmatprep.subr.mxu0 0.0
        %426 = vmatpush1.msra.mxu0 %v307
        %427 = vmatprep.subr.mxu0 0.0
        %428 = vmatpush1.msra.mxu0 %v306
        %429 = vmatprep.subr.mxu0 0.0
        %430 = vmatpush1.msra.mxu0 %v305
        %431 = vmatprep.subr.mxu0 0.0
        %432 = vmatpush1.msra.mxu0 %v304
        %433 = vmatprep.subr.mxu0 0.0
        %434 = vmatpush1.msra.mxu0 %v303
        %435 = vmatprep.subr.mxu0 0.0
        %436 = vmatpush1.msra.mxu0 %v302
        %437 = vmatprep.subr.mxu0 0.0
        %438 = vmatpush1.msra.mxu0 %v301
        %439 = vmatprep.subr.mxu0 0.0
        %440 = vmatpush1.msra.mxu0 %v300
        %441 = vmatprep.subr.mxu0 0.0
        %442 = vmatpush1.msra.mxu0 %v299
        %443 = vmatprep.subr.mxu0 0.0
        %444 = vmatpush1.msra.mxu0 %v298
        %445 = vmatprep.subr.mxu0 0.0
        %446 = vmatpush1.msra.mxu0 %v297
        %447 = vmatprep.subr.mxu0 0.0
        %448 = vmatpush1.msra.mxu0 %v296
        %449 = vmatprep.subr.mxu0 0.0
        %450 = vmatpush1.msra.mxu0 %v295
        %451 = vmatprep.subr.mxu0 0.0
        %452 = vmatpush1.msra.mxu0 %v294
        %453 = vmatprep.subr.mxu0 0.0
        %454 = vmatpush1.msra.mxu0 %v293
        %455 = vmatprep.subr.mxu0 0.0
        %456 = vmatpush2.msra.mxu0 %v324
        %457 = vmatprep.subr.mxu0 0.0
        %458 = vmatpush2.msra.mxu0 %v323
        %459 = vmatprep.subr.mxu0 0.0
        %460 = vmatpush2.msra.mxu0 %v322
        %461 = vmatprep.subr.mxu0 0.0
        %462 = vmatpush2.msra.mxu0 %v321
        %463 = vmatprep.subr.mxu0 0.0
        %464 = vmatpush2.msra.mxu0 %v320
        %465 = vmatprep.subr.mxu0 0.0
        %466 = vmatpush2.msra.mxu0 %v319
        %467 = vmatprep.subr.mxu0 0.0
        %468 = vmatpush2.msra.mxu0 %v318
        %469 = vmatprep.subr.mxu0 0.0
        %470 = vmatpush2.msra.mxu0 %v317
        %471 = vmatprep.subr.mxu0 0.0
        %472 = vmatpush2.msra.mxu0 %v316
        %473 = vmatprep.subr.mxu0 0.0
        %474 = vmatpush2.msra.mxu0 %v315
        %475 = vmatprep.subr.mxu0 0.0
        %476 = vmatpush2.msra.mxu0 %v314
        %477 = vmatprep.subr.mxu0 0.0
        %478 = vmatpush2.msra.mxu0 %v313
        %479 = vmatprep.subr.mxu0 0.0
        %480 = vmatpush2.msra.mxu0 %v312
        %481 = vmatprep.subr.mxu0 0.0
        %482 = vmatpush2.msra.mxu0 %v311
        %483 = vmatprep.subr.mxu0 0.0
        %484 = vmatpush2.msra.mxu0 %v310
        %485 = vmatprep.subr.mxu0 0.0
        %486 = vmatpush2.msra.mxu0 %v309
        %487 = vmatprep.mubr.f32.mxu0 %v248
        %488 = vmatmul.mubr.f32.gmra.mxu0 %v240
        %v489 = vpop.f32.mrf.mxu0
        %v490 = vadd.f32 %v415, %v489
        %v491 = vpop.f32.mrf.mxu0
        %492 = vmatprep.mubr.f32.mxu0 %v250
        %493 = vmatmul.mubr.f32.gmra.mxu0 %v242
        %v494 = vpop.f32.mrf.mxu0
        %v495 = vadd.f32 %v420, %v494
        %v496 = vpop.f32.mrf.mxu0
        %497 = vdwg.mxu0
        %498 = vmatprep.subr.mxu0 0.0
        %499 = vmatpush1.msra.mxu0 %v340
        %500 = vmatprep.subr.mxu0 0.0
        %501 = vmatpush1.msra.mxu0 %v339
        %502 = vmatprep.subr.mxu0 0.0
        %503 = vmatpush1.msra.mxu0 %v338
        %504 = vmatprep.subr.mxu0 0.0
        %505 = vmatpush1.msra.mxu0 %v337
        %506 = vmatprep.subr.mxu0 0.0
        %507 = vmatpush1.msra.mxu0 %v336
        %508 = vmatprep.subr.mxu0 0.0
        %509 = vmatpush1.msra.mxu0 %v335
        %510 = vmatprep.subr.mxu0 0.0
        %511 = vmatpush1.msra.mxu0 %v334
        %512 = vmatprep.subr.mxu0 0.0
        %513 = vmatpush1.msra.mxu0 %v333
        %514 = vmatprep.subr.mxu0 0.0
        %515 = vmatpush1.msra.mxu0 %v332
        %516 = vmatprep.subr.mxu0 0.0
        %517 = vmatpush1.msra.mxu0 %v331
        %518 = vmatprep.subr.mxu0 0.0
        %519 = vmatpush1.msra.mxu0 %v330
        %520 = vmatprep.subr.mxu0 0.0
        %521 = vmatpush1.msra.mxu0 %v329
        %522 = vmatprep.subr.mxu0 0.0
        %523 = vmatpush1.msra.mxu0 %v328
        %524 = vmatprep.subr.mxu0 0.0
        %525 = vmatpush1.msra.mxu0 %v327
        %526 = vmatprep.subr.mxu0 0.0
        %527 = vmatpush1.msra.mxu0 %v326
        %528 = vmatprep.subr.mxu0 0.0
        %529 = vmatpush1.msra.mxu0 %v325
        %530 = vmatprep.subr.mxu0 0.0
        %531 = vmatpush2.msra.mxu0 0.0
        %532 = vmatprep.subr.mxu0 0.0
        %533 = vmatpush2.msra.mxu0 0.0
        %534 = vmatprep.subr.mxu0 0.0
        %535 = vmatpush2.msra.mxu0 0.0
        %536 = vmatprep.subr.mxu0 0.0
        %537 = vmatpush2.msra.mxu0 0.0
        %538 = vmatprep.subr.mxu0 0.0
        %539 = vmatpush2.msra.mxu0 0.0
        %540 = vmatprep.subr.mxu0 0.0
        %541 = vmatpush2.msra.mxu0 0.0
        %542 = vmatprep.subr.mxu0 0.0
        %543 = vmatpush2.msra.mxu0 0.0
        %544 = vmatprep.subr.mxu0 0.0
        %545 = vmatpush2.msra.mxu0 0.0
        %546 = vmatprep.subr.mxu0 0.0
        %547 = vmatpush2.msra.mxu0 0.0
        %548 = vmatprep.subr.mxu0 0.0
        %549 = vmatpush2.msra.mxu0 0.0
        %550 = vmatprep.subr.mxu0 0.0
        %551 = vmatpush2.msra.mxu0 0.0
        %552 = vmatprep.subr.mxu0 0.0
        %553 = vmatpush2.msra.mxu0 0.0
        %554 = vmatprep.subr.mxu0 0.0
        %555 = vmatpush2.msra.mxu0 0.0
        %556 = vmatprep.subr.mxu0 0.0
        %557 = vmatpush2.msra.mxu0 0.0
        %558 = vmatprep.subr.mxu0 0.0
        %559 = vmatpush2.msra.mxu0 0.0
        %560 = vmatprep.subr.mxu0 0.0
        %561 = vmatpush2.msra.mxu0 0.0
        %562 = vmatprep.mubr.f32.mxu0 0.0
        %563 = vmatmul.mubr.f32.gmra.mxu0 %v256
        %v564 = vpop.f32.mrf.mxu0
        %v565 = vadd.f32 %v490, %v564
        %v566 = vpop.f32.mrf.mxu0
        %567 = vmatprep.mubr.f32.mxu0 0.0
        %568 = vmatmul.mubr.f32.gmra.mxu0 %v258
        %v569 = vpop.f32.mrf.mxu0
        %v570 = vadd.f32 %v495, %v569
        %v571 = vpop.f32.mrf.mxu0
        %572 = vdwg.mxu0
        %573 = vst [vmem:[%s221] sm:$0xff] %v565
        %574 = vst [vmem:[%s221 + $0x8] sm:$0xff] %v570
        %s575 = sand.u32 %s113, 1
        %s576 = scalar_lea.sflag [#allocation4], %s575
        %s577 = sand.u32 %s113, 1
        %s578 = smul.addr %s577, 16
        %s579 = scalar_lea.vmem [#allocation7], %s578
        // Predicated region
        $region41: #{tpu_custom_call.1} parent=31 // pred_check
          %p580 = pneg %p123
        $region42: #{tpu_custom_call.1} parent=31 // pred_check_branch
          %582 = sbr.rel (%p580) target = $region44
        $region43: #{tpu_custom_call.1} parent=31 // pred_region
          %s583 = smul.u32 2, %s26
          %s585 = ssub.s32 256, 256
          %586 = vsyncadd %s576, %s585
          %s587 = smul.addr %s25, 2
          %s588 = sadd.s32 %s583, %s587
          %s589 = smul.addr %s588, 128
          %s590 = scalar_lea.hbm %s3, %s589
          %s591 = sshll.u32 %s579, 4
          %s592 = int_to_ptr.vmem [resolvable:$true] %s591
          %597 = dma.vmem_to_hbm [thread:$0]  %s592, 256, %s590, %s576, 128, 128, 8
        $region44: #{tpu_custom_call.1} parent=31 // pred_fallthru
          _
      $region32: #{tpu_custom_call.1} parent=5 // pred_fallthru
        _
      %p598 = scmp.le.s32.totalorder 2, %s16
      // Predicated region
      $region45: #{tpu_custom_call.1} parent=5 // pred_check
        %p599 = pneg %p598
      $region46: #{tpu_custom_call.1} parent=5 // pred_check_branch
        %601 = sbr.rel (%p599) target = $region48
      $region47: #{tpu_custom_call.1} parent=5 // pred_region
        %s602 = ssub.s32 %s16, 2
        // Predicated region
        $region49: #{tpu_custom_call.1} parent=47 // pred_check
          %p603 = pneg %p129
        $region50: #{tpu_custom_call.1} parent=47 // pred_check_branch
          %605 = sbr.rel (%p603) target = $region52
        $region51: #{tpu_custom_call.1} parent=47 // pred_region
          %s606 = sand.u32 %s114, 1
          %s607 = scalar_lea.sflag [#allocation4], %s606
          %s608 = sand.u32 %s114, 1
          %s609 = smul.addr %s608, 16
          %s610 = scalar_lea.vmem [#allocation7], %s609
          %611 = dma.done %s607, 256
        $region52: #{tpu_custom_call.1} parent=47 // pred_fallthru
          _
      $region48: #{tpu_custom_call.1} parent=5 // pred_fallthru
        _
    $region6: #{tpu_custom_call.1} parent=1 // loop_footer
      %s20 = sadd.s32 1, %s16
    $region7: #{tpu_custom_call.1} parent=1 // loop_footer_branch
      %15 = sbr.rel target = $region3
    $region8: #{tpu_custom_call.1} parent=1 // loop_exit
      _
    %612 = vsyncpa [#allocation3], 1
    %s613 = scalar_lea.sflag [#allocation3], 1
    %614 = vsyncpa %s613, 1
    %615 = vsyncpa [#allocation6], 1
    %616 = vsyncpa [#allocation4], 1
    %s617 = scalar_lea.sflag [#allocation4], 1
    %618 = vsyncpa %s617, 1

// kernel: tpu_custom_call.1
$region0: #{tpu_custom_call.1}
  #allocation0 [shape = 'u32[]', space=smem, size = 0x4, offset = 0x4, fixed_abs, tag = 'smem constant byte address 0x4 - core index']
  #allocation1 [shape = 'u32[144,128]{1,0:T(1,128)}', space=vmem, size = 0x12000, scoped, tag = 'internal scratch']
  %s0 = inlined_call_operand.hbm [shape: f32[2,1,32,128], index: 0, kind: input, shape index: {}]
  %s1 = inlined_call_operand.hbm [shape: f32[640,128], index: 1, kind: input, shape index: {}]
  %s2 = inlined_call_operand.vmem [shape: f32[1,128], index: 2, kind: input, shape index: {}]
  %s3 = inlined_call_operand.hbm [shape: f32[2,16,128], index: 3, kind: output, shape index: {}]
  %s4 = sld [smem:[#allocation0]]
  $region53: #{tpu_custom_call.1} parent=0
    _
  %s6 = ssub.s32 1, %s4
  %s7 = scalar_select 0, %s6, %s4
  $region1: #{tpu_custom_call.1} parent=0
    #allocation2 [shape = 'u8[32768]{0}', space=vmem, size = 0x8000, scoped, tag = 'input window, operand 0']
    #allocation3 [shape = 's32[2]{0}', space=sflag, size = 0x8, scoped, tag = 'scoped memory for tpu_custom_call.1']
    #allocation4 [shape = 's32[2]{0}', space=sflag, size = 0x8, scoped, tag = 'scoped memory for tpu_custom_call.1']
    #allocation5 [shape = 'u8[327680]{0}', space=vmem, size = 0x50000, scoped, tag = 'input window, operand 1, single buffered']
    #allocation6 [shape = 's32[1]{0}', space=sflag, size = 0x4, scoped, tag = 'scoped memory for tpu_custom_call.1']
    #allocation7 [shape = 'u8[16384]{0}', space=vmem, size = 0x4000, scoped, tag = 'output window, operand 0']
    %8 = vsyncpa [#allocation3], 0
    %s9 = scalar_lea.sflag [#allocation3], 1
    %10 = vsyncpa %s9, 0
    %11 = vsyncpa [#allocation6], 0
    %12 = vsyncpa [#allocation4], 0
    %s13 = scalar_lea.sflag [#allocation4], 1
    %14 = vsyncpa %s13, 0
    loop: start=0, step=1, limit=4
    $region2: #{tpu_custom_call.1} parent=1 // loop_pre_header
      _
    $region3: #{tpu_custom_call.1} parent=1 // loop_header
      %s16 = sphi 0, %s20
      %p17 = scmp.ge.s32.totalorder %s16, 4
      %s23 = sphi 0, %s35
      %s24 = sphi 0, %s31
      %s25 = sphi 0, %s23
      %s26 = sphi 0, %s24
      %s27 = sphi 0, %s25
      %s28 = sphi 0, %s26
      %s40 = sphi 0, %s42
      %s43 = sphi 0, %s40
      %s44 = sphi 0, %s43
      %s60 = sphi 0, %s44
      %s64 = sphi 0, %s64
      %s66 = sphi 0, %s64
      %s67 = sphi 0, %s66
      %s81 = sphi 0, %s67
      %s85 = sphi 0, %s85
      %s87 = sphi 0, %s85
      %s88 = sphi 0, %s87
      %s102 = sphi 0, %s88
      %s110 = sphi 0, %s112
      %s113 = sphi 0, %s110
      %s114 = sphi 0, %s113
      %s130 = sphi 0, %s114
    $region4: #{tpu_custom_call.1} parent=1 // loop_header_branch
      %19 = sbr.rel (%p17) target = $region8
    $region5: #{tpu_custom_call.1} parent=1 // loop_body
      %s21 = ssub.s32 %s16, 1
      %s22 = ssub.s32 %s16, 2
      %s29 = sadd.s32 1, %s24
      %p30 = scmp.ge.s32.totalorder %s29, 1
      %s31 = scalar_select %p30, 0, %s29
      %s32 = sadd.s32 1, %s23
      %s33 = scalar_select %p30, %s32, %s23
      %p34 = scmp.ge.s32.totalorder %s33, 2
      %s35 = scalar_select %p34, 0, %s33
      %s36 = ssub.s32 %s23, %s35
      %s37 = ssub.s32 %s24, %s31
      %s38 = sor.u32 %s36, %s37
      %p39 = scmp.eq.s32.totalorder %s38, 0
      %s41 = sadd.s32 %s40, 1
      %s42 = scalar_select %p39, %s40, %s41
      %p45 = pneg %p39
      %p46 = scmp.eq.s32.totalorder %s16, 1
      %p47 = por %p45, %p46
      %p48 = scmp.ne.s32.totalorder %s40, %s43
      %p49 = scmp.eq.s32.totalorder %s16, 0
      %p50 = por %p48, %p49
      %p51 = scmp.ne.s32.totalorder %s40, %s43
      %p52 = scmp.eq.s32.totalorder %s21, 1
      %p53 = por %p51, %p52
      %p54 = scmp.ne.s32.totalorder %s43, %s44
      %p55 = scmp.eq.s32.totalorder %s21, 0
      %p56 = por %p54, %p55
      %p57 = scmp.ne.s32.totalorder %s43, %s44
      %p58 = scmp.eq.s32.totalorder %s22, 1
      %p59 = por %p57, %p58
      %p61 = scmp.ne.s32.totalorder %s44, %s60
      %p62 = scmp.eq.s32.totalorder %s22, 0
      %p63 = por %p61, %p62
      %s65 = sadd.s32 %s64, 1
      %p68 = scmp.eq.s32.totalorder %s16, 1
      %p69 = scmp.ne.s32.totalorder %s64, %s66
      %p70 = scmp.eq.s32.totalorder %s16, 0
      %p71 = por %p69, %p70
      %p72 = scmp.ne.s32.totalorder %s64, %s66
      %p73 = scmp.eq.s32.totalorder %s21, 1
      %p74 = por %p72, %p73
      %p75 = scmp.ne.s32.totalorder %s66, %s67
      %p76 = scmp.eq.s32.totalorder %s21, 0
      %p77 = por %p75, %p76
      %p78 = scmp.ne.s32.totalorder %s66, %s67
      %p79 = scmp.eq.s32.totalorder %s22, 1
      %p80 = por %p78, %p79
      %p82 = scmp.ne.s32.totalorder %s67, %s81
      %p83 = scmp.eq.s32.totalorder %s22, 0
      %p84 = por %p82, %p83
      %s86 = sadd.s32 %s85, 1
      %p89 = scmp.eq.s32.totalorder %s16, 1
      %p90 = scmp.ne.s32.totalorder %s85, %s87
      %p91 = scmp.eq.s32.totalorder %s16, 0
      %p92 = por %p90, %p91
      %p93 = scmp.ne.s32.totalorder %s85, %s87
      %p94 = scmp.eq.s32.totalorder %s21, 1
      %p95 = por %p93, %p94
      %p96 = scmp.ne.s32.totalorder %s87, %s88
      %p97 = scmp.eq.s32.totalorder %s21, 0
      %p98 = por %p96, %p97
      %p99 = scmp.ne.s32.totalorder %s87, %s88
      %p100 = scmp.eq.s32.totalorder %s22, 1
      %p101 = por %p99, %p100
      %p103 = scmp.ne.s32.totalorder %s88, %s102
      %p104 = scmp.eq.s32.totalorder %s22, 0
      %p105 = por %p103, %p104
      %s106 = ssub.s32 %s23, %s35
      %s107 = ssub.s32 %s24, %s31
      %s108 = sor.u32 %s106, %s107
      %p109 = scmp.eq.s32.totalorder %s108, 0
      %s111 = sadd.s32 %s110, 1
      %s112 = scalar_select %p109, %s110, %s111
      %p115 = pneg %p109
      %p116 = scmp.eq.s32.totalorder %s16, 1
      %p117 = por %p115, %p116
      %p118 = scmp.ne.s32.totalorder %s110, %s113
      %p119 = scmp.eq.s32.totalorder %s16, 0
      %p120 = por %p118, %p119
      %p121 = scmp.ne.s32.totalorder %s110, %s113
      %p122 = scmp.eq.s32.totalorder %s21, 1
      %p123 = por %p121, %p122
      %p124 = scmp.ne.s32.totalorder %s113, %s114
      %p125 = scmp.eq.s32.totalorder %s21, 0
      %p126 = por %p124, %p125
      %p127 = scmp.ne.s32.totalorder %s113, %s114
      %p128 = scmp.eq.s32.totalorder %s22, 1
      %p129 = por %p127, %p128
      %p131 = scmp.ne.s32.totalorder %s114, %s130
      %p132 = scmp.eq.s32.totalorder %s22, 0
      %p133 = por %p131, %p132
      %p134 = scmp.le.s32.totalorder 1, %s16
      %p135 = scmp.lt.s32.totalorder %s16, 3
      %p136 = pnand %p134, %p135
      %p137 = pneg %p136
      // Predicated region
      $region9: #{tpu_custom_call.1} parent=5 // pred_check
        _
      $region10: #{tpu_custom_call.1} parent=5 // pred_check_branch
        %139 = sbr.rel (%p136) target = $region12
      $region11: #{tpu_custom_call.1} parent=5 // pred_region
        %s140 = ssub.s32 %s16, 1
        // Predicated region
        $region13: #{tpu_custom_call.1} parent=11 // pred_check
          %p141 = pneg %p77
        $region14: #{tpu_custom_call.1} parent=11 // pred_check_branch
          %143 = sbr.rel (%p141) target = $region16
        $region15: #{tpu_custom_call.1} parent=11 // pred_region
          %s145 = ssub.s32 10240, 10240
          %146 = vsyncadd [#allocation6], %s145
          %s147 = sshll.u32 [#allocation5], 4
          %s148 = int_to_ptr.vmem [resolvable:$true] %s147
          %153 = dma.hbm_to_vmem [thread:$0]  %s1, 10240, %s148, [#allocation6], 128, 128, 8
        $region16: #{tpu_custom_call.1} parent=11 // pred_fallthru
          _
        // Predicated region
        $region17: #{tpu_custom_call.1} parent=11 // pred_check
          %p154 = pneg %p98
        $region18: #{tpu_custom_call.1} parent=11 // pred_check_branch
          %156 = sbr.rel (%p154) target = $region20
        $region19: #{tpu_custom_call.1} parent=11 // pred_region
          _
        $region20: #{tpu_custom_call.1} parent=11 // pred_fallthru
          _
      $region12: #{tpu_custom_call.1} parent=5 // pred_fallthru
        _
      %p157 = scmp.lt.s32.totalorder %s16, 2
      // Predicated region
      $region21: #{tpu_custom_call.1} parent=5 // pred_check
        %p158 = pneg %p157
      $region22: #{tpu_custom_call.1} parent=5 // pred_check_branch
        %160 = sbr.rel (%p158) target = $region24
      $region23: #{tpu_custom_call.1} parent=5 // pred_region
        // Predicated region
        $region25: #{tpu_custom_call.1} parent=23 // pred_check
          %p161 = pneg %p50
        $region26: #{tpu_custom_call.1} parent=23 // pred_check_branch
          %163 = sbr.rel (%p161) target = $region28
        $region27: #{tpu_custom_call.1} parent=23 // pred_region
          %s164 = sand.u32 %s40, 1
          %s165 = scalar_lea.sflag [#allocation3], %s164
          %s166 = sand.u32 %s40, 1
          %s167 = smul.addr %s166, 32
          %s168 = scalar_lea.vmem [#allocation2], %s167
          %s170 = ssub.s32 512, 512
          %171 = vsyncadd %s165, %s170
          %s172 = smul.addr %s24, 4
          %s173 = smul.addr %s23, 4
          %s174 = sadd.s32 %s172, %s173
          %s175 = smul.addr %s174, 128
          %s176 = scalar_lea.hbm %s0, %s175
          %s177 = sshll.u32 %s168, 4
          %s178 = int_to_ptr.vmem [resolvable:$true] %s177
          %183 = dma.hbm_to_vmem [thread:$0]  %s176, 512, %s178, %s165, 128, 128, 8
        $region28: #{tpu_custom_call.1} parent=23 // pred_fallthru
          _
      $region24: #{tpu_custom_call.1} parent=5 // pred_fallthru
        _
      %p184 = scmp.le.s32.totalorder 1, %s16
      %p185 = scmp.lt.s32.totalorder %s16, 3
      %p186 = pnand %p184, %p185
      %p187 = pneg %p186
      // Predicated region
      $region29: #{tpu_custom_call.1} parent=5 // pred_check
        _
      $region30: #{tpu_custom_call.1} parent=5 // pred_check_branch
        %189 = sbr.rel (%p186) target = $region32
      $region31: #{tpu_custom_call.1} parent=5 // pred_region
        %s190 = ssub.s32 %s16, 1
        %s191 = sand.u32 %s43, 1
        %s192 = scalar_lea.sflag [#allocation3], %s191
        %s193 = sand.u32 %s43, 1
        %s194 = smul.addr %s193, 32
        %s195 = scalar_lea.vmem [#allocation2], %s194
        // Predicated region
        $region33: #{tpu_custom_call.1} parent=31 // pred_check
          %p196 = pneg %p56
        $region34: #{tpu_custom_call.1} parent=31 // pred_check_branch
          %198 = sbr.rel (%p196) target = $region36
        $region35: #{tpu_custom_call.1} parent=31 // pred_region
          %199 = dma.done %s192, 512
        $region36: #{tpu_custom_call.1} parent=31 // pred_fallthru
          _
        // Predicated region
        $region37: #{tpu_custom_call.1} parent=31 // pred_check
          %p200 = pneg %p77
        $region38: #{tpu_custom_call.1} parent=31 // pred_check_branch
          %202 = sbr.rel (%p200) target = $region40
        $region39: #{tpu_custom_call.1} parent=31 // pred_region
          %203 = dma.done [#allocation6], 10240
        $region40: #{tpu_custom_call.1} parent=31 // pred_fallthru
          _
        %s204 = sand.u32 %s43, 1
        %s205 = scalar_lea.sflag [#allocation3], %s204
        %s206 = sand.u32 %s43, 1
        %s207 = smul.addr %s206, 32
        %s208 = scalar_lea.vmem [#allocation2], %s207
        %p209 = pneg %p56
        %p210 = pneg %p53
        %p211 = pneg %p77
        %p212 = pneg %p74
        %p213 = pneg %p98
        %p214 = pneg %p95
        %p215 = pneg %p126
        %p216 = pneg %p123
        %s217 = sand.u32 %s113, 1
        %s218 = scalar_lea.sflag [#allocation4], %s217
        %s219 = sand.u32 %s113, 1
        %s220 = smul.addr %s219, 16
        %s221 = scalar_lea.vmem [#allocation7], %s220
        %s222 = smul.u32 2, %s26
        %v223 = vld [vmem:[%s195] sm:$0xff]
        %v224 = vld [vmem:[%s195 + $0x8] sm:$0xff]
        %v225 = vld [vmem:[%s195 + $0x10] sm:$0xff]
        %vm229 = vcmask 1046528
        %v230 = vrot.slane %v223, 1
        %v231 = vrot.slane %v224, 1
        %v232 = vsel %vm229, %v230, %v231
        %v233 = vrot.slane %v225, 1
        %v234 = vsel %vm229, %v231, %v233
        %vm237 = vcmask 1045504
        %v238 = vrot.slane %v223, 2
        %v239 = vrot.slane %v224, 2
        %v240 = vsel %vm237, %v238, %v239
        %v241 = vrot.slane %v225, 2
        %v242 = vsel %vm237, %v239, %v241
        %vm245 = vcmask 1044480
        %v246 = vrot.slane %v223, 3
        %v247 = vrot.slane %v224, 3
        %v248 = vsel %vm245, %v246, %v247
        %v249 = vrot.slane %v225, 3
        %v250 = vsel %vm245, %v247, %v249
        %vm253 = vcmask 1043456
        %v254 = vrot.slane %v223, 4
        %v255 = vrot.slane %v224, 4
        %v256 = vsel %vm253, %v254, %v255
        %v257 = vrot.slane %v225, 4
        %v258 = vsel %vm253, %v255, %v257
        %v261 = vld [vmem:[#allocation5] sm:$0xff]
        %v262 = vld [vmem:[#allocation5 + $0x8] sm:$0xff]
        %v263 = vld [vmem:[#allocation5 + $0x10] sm:$0xff]
        %v264 = vld [vmem:[#allocation5 + $0x18] sm:$0xff]
        %v265 = vld [vmem:[#allocation5 + $0x20] sm:$0xff]
        %v266 = vld [vmem:[#allocation5 + $0x28] sm:$0xff]
        %v267 = vld [vmem:[#allocation5 + $0x30] sm:$0xff]
        %v268 = vld [vmem:[#allocation5 + $0x38] sm:$0xff]
        %v269 = vld [vmem:[#allocation5 + $0x40] sm:$0xff]
        %v270 = vld [vmem:[#allocation5 + $0x48] sm:$0xff]
        %v271 = vld [vmem:[#allocation5 + $0x50] sm:$0xff]
        %v272 = vld [vmem:[#allocation5 + $0x58] sm:$0xff]
        %v273 = vld [vmem:[#allocation5 + $0x60] sm:$0xff]
        %v274 = vld [vmem:[#allocation5 + $0x68] sm:$0xff]
        %v275 = vld [vmem:[#allocation5 + $0x70] sm:$0xff]
        %v276 = vld [vmem:[#allocation5 + $0x78] sm:$0xff]
        %v277 = vld [vmem:[#allocation5 + $0x80] sm:$0xff]
        %v278 = vld [vmem:[#allocation5 + $0x88] sm:$0xff]
        %v279 = vld [vmem:[#allocation5 + $0x90] sm:$0xff]
        %v280 = vld [vmem:[#allocation5 + $0x98] sm:$0xff]
        %v281 = vld [vmem:[#allocation5 + $0xa0] sm:$0xff]
        %v282 = vld [vmem:[#allocation5 + $0xa8] sm:$0xff]
        %v283 = vld [vmem:[#allocation5 + $0xb0] sm:$0xff]
        %v284 = vld [vmem:[#allocation5 + $0xb8] sm:$0xff]
        %v285 = vld [vmem:[#allocation5 + $0xc0] sm:$0xff]
        %v286 = vld [vmem:[#allocation5 + $0xc8] sm:$0xff]
        %v287 = vld [vmem:[#allocation5 + $0xd0] sm:$0xff]
        %v288 = vld [vmem:[#allocation5 + $0xd8] sm:$0xff]
        %v289 = vld [vmem:[#allocation5 + $0xe0] sm:$0xff]
        %v290 = vld [vmem:[#allocation5 + $0xe8] sm:$0xff]
        %v291 = vld [vmem:[#allocation5 + $0xf0] sm:$0xff]
        %v292 = vld [vmem:[#allocation5 + $0xf8] sm:$0xff]
        %v293 = vld [vmem:[#allocation5 + $0x100] sm:$0xff]
        %v294 = vld [vmem:[#allocation5 + $0x108] sm:$0xff]
        %v295 = vld [vmem:[#allocation5 + $0x110] sm:$0xff]
        %v296 = vld [vmem:[#allocation5 + $0x118] sm:$0xff]
        %v297 = vld [vmem:[#allocation5 + $0x120] sm:$0xff]
        %v298 = vld [vmem:[#allocation5 + $0x128] sm:$0xff]
        %v299 = vld [vmem:[#allocation5 + $0x130] sm:$0xff]
        %v300 = vld [vmem:[#allocation5 + $0x138] sm:$0xff]
        %v301 = vld [vmem:[#allocation5 + $0x140] sm:$0xff]
        %v302 = vld [vmem:[#allocation5 + $0x148] sm:$0xff]
        %v303 = vld [vmem:[#allocation5 + $0x150] sm:$0xff]
        %v304 = vld [vmem:[#allocation5 + $0x158] sm:$0xff]
        %v305 = vld [vmem:[#allocation5 + $0x160] sm:$0xff]
        %v306 = vld [vmem:[#allocation5 + $0x168] sm:$0xff]
        %v307 = vld [vmem:[#allocation5 + $0x170] sm:$0xff]
        %v308 = vld [vmem:[#allocation5 + $0x178] sm:$0xff]
        %v309 = vld [vmem:[#allocation5 + $0x180] sm:$0xff]
        %v310 = vld [vmem:[#allocation5 + $0x188] sm:$0xff]
        %v311 = vld [vmem:[#allocation5 + $0x190] sm:$0xff]
        %v312 = vld [vmem:[#allocation5 + $0x198] sm:$0xff]
        %v313 = vld [vmem:[#allocation5 + $0x1a0] sm:$0xff]
        %v314 = vld [vmem:[#allocation5 + $0x1a8] sm:$0xff]
        %v315 = vld [vmem:[#allocation5 + $0x1b0] sm:$0xff]
        %v316 = vld [vmem:[#allocation5 + $0x1b8] sm:$0xff]
        %v317 = vld [vmem:[#allocation5 + $0x1c0] sm:$0xff]
        %v318 = vld [vmem:[#allocation5 + $0x1c8] sm:$0xff]
        %v319 = vld [vmem:[#allocation5 + $0x1d0] sm:$0xff]
        %v320 = vld [vmem:[#allocation5 + $0x1d8] sm:$0xff]
        %v321 = vld [vmem:[#allocation5 + $0x1e0] sm:$0xff]
        %v322 = vld [vmem:[#allocation5 + $0x1e8] sm:$0xff]
        %v323 = vld [vmem:[#allocation5 + $0x1f0] sm:$0xff]
        %v324 = vld [vmem:[#allocation5 + $0x1f8] sm:$0xff]
        %v325 = vld [vmem:[#allocation5 + $0x200] sm:$0xff]
        %v326 = vld [vmem:[#allocation5 + $0x208] sm:$0xff]
        %v327 = vld [vmem:[#allocation5 + $0x210] sm:$0xff]
        %v328 = vld [vmem:[#allocation5 + $0x218] sm:$0xff]
        %v329 = vld [vmem:[#allocation5 + $0x220] sm:$0xff]
        %v330 = vld [vmem:[#allocation5 + $0x228] sm:$0xff]
        %v331 = vld [vmem:[#allocation5 + $0x230] sm:$0xff]
        %v332 = vld [vmem:[#allocation5 + $0x238] sm:$0xff]
        %v333 = vld [vmem:[#allocation5 + $0x240] sm:$0xff]
        %v334 = vld [vmem:[#allocation5 + $0x248] sm:$0xff]
        %v335 = vld [vmem:[#allocation5 + $0x250] sm:$0xff]
        %v336 = vld [vmem:[#allocation5 + $0x258] sm:$0xff]
        %v337 = vld [vmem:[#allocation5 + $0x260] sm:$0xff]
        %v338 = vld [vmem:[#allocation5 + $0x268] sm:$0xff]
        %v339 = vld [vmem:[#allocation5 + $0x270] sm:$0xff]
        %v340 = vld [vmem:[#allocation5 + $0x278] sm:$0xff]
        %v341 = vld [vmem:[%s2] sm:$0x1]
        %v343 = vlaneseq
        %v344 = vshrl.u32 %v343, 7
        %v345 = vsub.s32 0, %v344
        %v346 = vrot.slane %v341, %v345
        %348 = vmatprep.subr.mxu0 0.0
        %349 = vmatpush1.msra.mxu0 %v276
        %350 = vmatprep.subr.mxu0 0.0
        %351 = vmatpush1.msra.mxu0 %v275
        %352 = vmatprep.subr.mxu0 0.0
        %353 = vmatpush1.msra.mxu0 %v274
        %354 = vmatprep.subr.mxu0 0.0
        %355 = vmatpush1.msra.mxu0 %v273
        %356 = vmatprep.subr.mxu0 0.0
        %357 = vmatpush1.msra.mxu0 %v272
        %358 = vmatprep.subr.mxu0 0.0
        %359 = vmatpush1.msra.mxu0 %v271
        %360 = vmatprep.subr.mxu0 0.0
        %361 = vmatpush1.msra.mxu0 %v270
        %362 = vmatprep.subr.mxu0 0.0
        %363 = vmatpush1.msra.mxu0 %v269
        %364 = vmatprep.subr.mxu0 0.0
        %365 = vmatpush1.msra.mxu0 %v268
        %366 = vmatprep.subr.mxu0 0.0
        %367 = vmatpush1.msra.mxu0 %v267
        %368 = vmatprep.subr.mxu0 0.0
        %369 = vmatpush1.msra.mxu0 %v266
        %370 = vmatprep.subr.mxu0 0.0
        %371 = vmatpush1.msra.mxu0 %v265
        %372 = vmatprep.subr.mxu0 0.0
        %373 = vmatpush1.msra.mxu0 %v264
        %374 = vmatprep.subr.mxu0 0.0
        %375 = vmatpush1.msra.mxu0 %v263
        %376 = vmatprep.subr.mxu0 0.0
        %377 = vmatpush1.msra.mxu0 %v262
        %378 = vmatprep.subr.mxu0 0.0
        %379 = vmatpush1.msra.mxu0 %v261
        %380 = vmatprep.subr.mxu0 0.0
        %381 = vmatpush2.msra.mxu0 %v292
        %382 = vmatprep.subr.mxu0 0.0
        %383 = vmatpush2.msra.mxu0 %v291
        %384 = vmatprep.subr.mxu0 0.0
        %385 = vmatpush2.msra.mxu0 %v290
        %386 = vmatprep.subr.mxu0 0.0
        %387 = vmatpush2.msra.mxu0 %v289
        %388 = vmatprep.subr.mxu0 0.0
        %389 = vmatpush2.msra.mxu0 %v288
        %390 = vmatprep.subr.mxu0 0.0
        %391 = vmatpush2.msra.mxu0 %v287
        %392 = vmatprep.subr.mxu0 0.0
        %393 = vmatpush2.msra.mxu0 %v286
        %394 = vmatprep.subr.mxu0 0.0
        %395 = vmatpush2.msra.mxu0 %v285
        %396 = vmatprep.subr.mxu0 0.0
        %397 = vmatpush2.msra.mxu0 %v284
        %398 = vmatprep.subr.mxu0 0.0
        %399 = vmatpush2.msra.mxu0 %v283
        %400 = vmatprep.subr.mxu0 0.0
        %401 = vmatpush2.msra.mxu0 %v282
        %402 = vmatprep.subr.mxu0 0.0
        %403 = vmatpush2.msra.mxu0 %v281
        %404 = vmatprep.subr.mxu0 0.0
        %405 = vmatpush2.msra.mxu0 %v280
        %406 = vmatprep.subr.mxu0 0.0
        %407 = vmatpush2.msra.mxu0 %v279
        %408 = vmatprep.subr.mxu0 0.0
        %409 = vmatpush2.msra.mxu0 %v278
        %410 = vmatprep.subr.mxu0 0.0
        %411 = vmatpush2.msra.mxu0 %v277
        %412 = vmatprep.mubr.f32.mxu0 %v232
        %413 = vmatmul.mubr.f32.gmra.mxu0 %v223
        %v414 = vpop.f32.mrf.mxu0
        %v415 = vadd.f32 %v346, %v414
        %v416 = vpop.f32.mrf.mxu0
        %417 = vmatprep.mubr.f32.mxu0 %v234
        %418 = vmatmul.mubr.f32.gmra.mxu0 %v224
        %v419 = vpop.f32.mrf.mxu0
        %v420 = vadd.f32 %v346, %v419
        %v421 = vpop.f32.mrf.mxu0
        %422 = vdwg.mxu0
        %423 = vmatprep.subr.mxu0 0.0
        %424 = vmatpush1.msra.mxu0 %v308
        %425 = vmatprep.subr.mxu0 0.0
        %426 = vmatpush1.msra.mxu0 %v307
        %427 = vmatprep.subr.mxu0 0.0
        %428 = vmatpush1.msra.mxu0 %v306
        %429 = vmatprep.subr.mxu0 0.0
        %430 = vmatpush1.msra.mxu0 %v305
        %431 = vmatprep.subr.mxu0 0.0
        %432 = vmatpush1.msra.mxu0 %v304
        %433 = vmatprep.subr.mxu0 0.0
        %434 = vmatpush1.msra.mxu0 %v303
        %435 = vmatprep.subr.mxu0 0.0
        %436 = vmatpush1.msra.mxu0 %v302
        %437 = vmatprep.subr.mxu0 0.0
        %438 = vmatpush1.msra.mxu0 %v301
        %439 = vmatprep.subr.mxu0 0.0
        %440 = vmatpush1.msra.mxu0 %v300
        %441 = vmatprep.subr.mxu0 0.0
        %442 = vmatpush1.msra.mxu0 %v299
        %443 = vmatprep.subr.mxu0 0.0
        %444 = vmatpush1.msra.mxu0 %v298
        %445 = vmatprep.subr.mxu0 0.0
        %446 = vmatpush1.msra.mxu0 %v297
        %447 = vmatprep.subr.mxu0 0.0
        %448 = vmatpush1.msra.mxu0 %v296
        %449 = vmatprep.subr.mxu0 0.0
        %450 = vmatpush1.msra.mxu0 %v295
        %451 = vmatprep.subr.mxu0 0.0
        %452 = vmatpush1.msra.mxu0 %v294
        %453 = vmatprep.subr.mxu0 0.0
        %454 = vmatpush1.msra.mxu0 %v293
        %455 = vmatprep.subr.mxu0 0.0
        %456 = vmatpush2.msra.mxu0 %v324
        %457 = vmatprep.subr.mxu0 0.0
        %458 = vmatpush2.msra.mxu0 %v323
        %459 = vmatprep.subr.mxu0 0.0
        %460 = vmatpush2.msra.mxu0 %v322
        %461 = vmatprep.subr.mxu0 0.0
        %462 = vmatpush2.msra.mxu0 %v321
        %463 = vmatprep.subr.mxu0 0.0
        %464 = vmatpush2.msra.mxu0 %v320
        %465 = vmatprep.subr.mxu0 0.0
        %466 = vmatpush2.msra.mxu0 %v319
        %467 = vmatprep.subr.mxu0 0.0
        %468 = vmatpush2.msra.mxu0 %v318
        %469 = vmatprep.subr.mxu0 0.0
        %470 = vmatpush2.msra.mxu0 %v317
        %471 = vmatprep.subr.mxu0 0.0
        %472 = vmatpush2.msra.mxu0 %v316
        %473 = vmatprep.subr.mxu0 0.0
        %474 = vmatpush2.msra.mxu0 %v315
        %475 = vmatprep.subr.mxu0 0.0
        %476 = vmatpush2.msra.mxu0 %v314
        %477 = vmatprep.subr.mxu0 0.0
        %478 = vmatpush2.msra.mxu0 %v313
        %479 = vmatprep.subr.mxu0 0.0
        %480 = vmatpush2.msra.mxu0 %v312
        %481 = vmatprep.subr.mxu0 0.0
        %482 = vmatpush2.msra.mxu0 %v311
        %483 = vmatprep.subr.mxu0 0.0
        %484 = vmatpush2.msra.mxu0 %v310
        %485 = vmatprep.subr.mxu0 0.0
        %486 = vmatpush2.msra.mxu0 %v309
        %487 = vmatprep.mubr.f32.mxu0 %v248
        %488 = vmatmul.mubr.f32.gmra.mxu0 %v240
        %v489 = vpop.f32.mrf.mxu0
        %v490 = vadd.f32 %v415, %v489
        %v491 = vpop.f32.mrf.mxu0
        %492 = vmatprep.mubr.f32.mxu0 %v250
        %493 = vmatmul.mubr.f32.gmra.mxu0 %v242
        %v494 = vpop.f32.mrf.mxu0
        %v495 = vadd.f32 %v420, %v494
        %v496 = vpop.f32.mrf.mxu0
        %497 = vdwg.mxu0
        %498 = vmatprep.subr.mxu0 0.0
        %499 = vmatpush1.msra.mxu0 %v340
        %500 = vmatprep.subr.mxu0 0.0
        %501 = vmatpush1.msra.mxu0 %v339
        %502 = vmatprep.subr.mxu0 0.0
        %503 = vmatpush1.msra.mxu0 %v338
        %504 = vmatprep.subr.mxu0 0.0
        %505 = vmatpush1.msra.mxu0 %v337
        %506 = vmatprep.subr.mxu0 0.0
        %507 = vmatpush1.msra.mxu0 %v336
        %508 = vmatprep.subr.mxu0 0.0
        %509 = vmatpush1.msra.mxu0 %v335
        %510 = vmatprep.subr.mxu0 0.0
        %511 = vmatpush1.msra.mxu0 %v334
        %512 = vmatprep.subr.mxu0 0.0
        %513 = vmatpush1.msra.mxu0 %v333
        %514 = vmatprep.subr.mxu0 0.0
        %515 = vmatpush1.msra.mxu0 %v332
        %516 = vmatprep.subr.mxu0 0.0
        %517 = vmatpush1.msra.mxu0 %v331
        %518 = vmatprep.subr.mxu0 0.0
        %519 = vmatpush1.msra.mxu0 %v330
        %520 = vmatprep.subr.mxu0 0.0
        %521 = vmatpush1.msra.mxu0 %v329
        %522 = vmatprep.subr.mxu0 0.0
        %523 = vmatpush1.msra.mxu0 %v328
        %524 = vmatprep.subr.mxu0 0.0
        %525 = vmatpush1.msra.mxu0 %v327
        %526 = vmatprep.subr.mxu0 0.0
        %527 = vmatpush1.msra.mxu0 %v326
        %528 = vmatprep.subr.mxu0 0.0
        %529 = vmatpush1.msra.mxu0 %v325
        %530 = vmatprep.subr.mxu0 0.0
        %531 = vmatpush2.msra.mxu0 0.0
        %532 = vmatprep.subr.mxu0 0.0
        %533 = vmatpush2.msra.mxu0 0.0
        %534 = vmatprep.subr.mxu0 0.0
        %535 = vmatpush2.msra.mxu0 0.0
        %536 = vmatprep.subr.mxu0 0.0
        %537 = vmatpush2.msra.mxu0 0.0
        %538 = vmatprep.subr.mxu0 0.0
        %539 = vmatpush2.msra.mxu0 0.0
        %540 = vmatprep.subr.mxu0 0.0
        %541 = vmatpush2.msra.mxu0 0.0
        %542 = vmatprep.subr.mxu0 0.0
        %543 = vmatpush2.msra.mxu0 0.0
        %544 = vmatprep.subr.mxu0 0.0
        %545 = vmatpush2.msra.mxu0 0.0
        %546 = vmatprep.subr.mxu0 0.0
        %547 = vmatpush2.msra.mxu0 0.0
        %548 = vmatprep.subr.mxu0 0.0
        %549 = vmatpush2.msra.mxu0 0.0
        %550 = vmatprep.subr.mxu0 0.0
        %551 = vmatpush2.msra.mxu0 0.0
        %552 = vmatprep.subr.mxu0 0.0
        %553 = vmatpush2.msra.mxu0 0.0
        %554 = vmatprep.subr.mxu0 0.0
        %555 = vmatpush2.msra.mxu0 0.0
        %556 = vmatprep.subr.mxu0 0.0
        %557 = vmatpush2.msra.mxu0 0.0
        %558 = vmatprep.subr.mxu0 0.0
        %559 = vmatpush2.msra.mxu0 0.0
        %560 = vmatprep.subr.mxu0 0.0
        %561 = vmatpush2.msra.mxu0 0.0
        %562 = vmatprep.mubr.f32.mxu0 0.0
        %563 = vmatmul.mubr.f32.gmra.mxu0 %v256
        %v564 = vpop.f32.mrf.mxu0
        %v565 = vadd.f32 %v490, %v564
        %v566 = vpop.f32.mrf.mxu0
        %567 = vmatprep.mubr.f32.mxu0 0.0
        %568 = vmatmul.mubr.f32.gmra.mxu0 %v258
        %v569 = vpop.f32.mrf.mxu0
        %v570 = vadd.f32 %v495, %v569
        %v571 = vpop.f32.mrf.mxu0
        %572 = vdwg.mxu0
        %573 = vst [vmem:[%s221] sm:$0xff] %v565
        %574 = vst [vmem:[%s221 + $0x8] sm:$0xff] %v570
        %s575 = sand.u32 %s113, 1
        %s576 = scalar_lea.sflag [#allocation4], %s575
        %s577 = sand.u32 %s113, 1
        %s578 = smul.addr %s577, 16
        %s579 = scalar_lea.vmem [#allocation7], %s578
        // Predicated region
        $region41: #{tpu_custom_call.1} parent=31 // pred_check
          %p580 = pneg %p123
        $region42: #{tpu_custom_call.1} parent=31 // pred_check_branch
          %582 = sbr.rel (%p580) target = $region44
        $region43: #{tpu_custom_call.1} parent=31 // pred_region
          %s583 = smul.u32 2, %s26
          %s585 = ssub.s32 256, 256
          %586 = vsyncadd %s576, %s585
          %s587 = smul.addr %s25, 2
          %s588 = sadd.s32 %s583, %s587
          %s589 = smul.addr %s588, 128
          %s590 = scalar_lea.hbm %s3, %s589
          %s591 = sshll.u32 %s579, 4
          %s592 = int_to_ptr.vmem [resolvable:$true] %s591
          %597 = dma.vmem_to_hbm [thread:$0]  %s592, 256, %s590, %s576, 128, 128, 8
        $region44: #{tpu_custom_call.1} parent=31 // pred_fallthru
          _
      $region32: #{tpu_custom_call.1} parent=5 // pred_fallthru
        _
      %p598 = scmp.le.s32.totalorder 2, %s16
      // Predicated region
      $region45: #{tpu_custom_call.1} parent=5 // pred_check
        %p599 = pneg %p598
      $region46: #{tpu_custom_call.1} parent=5 // pred_check_branch
        %601 = sbr.rel (%p599) target = $region48
      $region47: #{tpu_custom_call.1} parent=5 // pred_region
        %s602 = ssub.s32 %s16, 2
        // Predicated region
        $region49: #{tpu_custom_call.1} parent=47 // pred_check
          %p603 = pneg %p129
        $region50: #{tpu_custom_call.1} parent=47 // pred_check_branch
          %605 = sbr.rel (%p603) target = $region52
        $region51: #{tpu_custom_call.1} parent=47 // pred_region
          %s606 = sand.u32 %s114, 1
          %s607 = scalar_lea.sflag [#allocation4], %s606
          %s608 = sand.u32 %s114, 1
          %s609 = smul.addr %s608, 16
          %s610 = scalar_lea.vmem [#allocation7], %s609
          %611 = dma.done %s607, 256
        $region52: #{tpu_custom_call.1} parent=47 // pred_fallthru
          _
      $region48: #{tpu_custom_call.1} parent=5 // pred_fallthru
        _
    $region6: #{tpu_custom_call.1} parent=1 // loop_footer
      %s20 = sadd.s32 1, %s16
    $region7: #{tpu_custom_call.1} parent=1 // loop_footer_branch
      %15 = sbr.rel target = $region3
    $region8: #{tpu_custom_call.1} parent=1 // loop_exit
      _
    %612 = vsyncpa [#allocation3], 1
    %s613 = scalar_lea.sflag [#allocation3], 1
    %614 = vsyncpa %s613, 1
    %615 = vsyncpa [#allocation6], 1
    %616 = vsyncpa [#allocation4], 1
    %s617 = scalar_lea.sflag [#allocation4], 1
    %618 = vsyncpa %s617, 1

</llo_original>
